<compile_context>
chip_gen: v6e
topology: v6e:2x2x1
jax: 0.10.0
libtpu: 0.0.40
codegen_flags: <defaults>
</compile_context>

<pallas_src>
import functools

import jax
import jax.numpy as jnp
from jax.experimental import pallas as pl
from jax.experimental.pallas import tpu as pltpu


# ----------------------------------------------------------------------------
# Pallas kernel: partial loss over one (tile x tile) block of the pair matrix.
# ----------------------------------------------------------------------------
def _pair_loss_kernel(e_i_ref, e_j_ref, sq_i_ref, sq_j_ref, lab_i_ref, lab_j_ref,
                      out_ref, *, margin, batch, tile, precision):
    # Row/column embedding blocks in native dtype straight into the MXU
    # (bf16 single pass; f32 uses HIGHEST-precision passes), f32 accumulation.
    gram = jax.lax.dot_general(
        e_i_ref[...], e_j_ref[...],
        dimension_numbers=(((1,), (1,)), ((), ())),
        preferred_element_type=jnp.float32,
        precision=precision)                                   # (tile, tile) f32

    # Squared pairwise distances from precomputed squared norms; clamp the
    # tiny negative values the Gram form can produce.
    d2 = jnp.maximum(sq_i_ref[...] + sq_j_ref[...] - 2.0 * gram, 0.0)

    # All-pairs selector: strict upper triangle of the TRUE (un-padded) batch.
    row = pl.program_id(0) * tile + jax.lax.broadcasted_iota(
        jnp.int32, (tile, tile), 0)
    col = pl.program_id(1) * tile + jax.lax.broadcasted_iota(
        jnp.int32, (tile, tile), 1)
    valid = (row < batch) & (col < batch) & (row < col)
    same = lab_i_ref[...] == lab_j_ref[...]                    # (T,1)==(1,T)->(T,T)

    # positive pairs: ||a-b||^2 ; negative pairs: relu(margin - ||a-b||)^2
    hinge = jnp.maximum(margin - jnp.sqrt(d2), 0.0)
    per_pair = jnp.where(same, d2, hinge * hinge)
    per_pair = jnp.where(valid, per_pair, 0.0)

    partial = jnp.sum(per_pair).reshape(1, 1)
    # Lane-dense (8,128) per-step output tile -> unmasked stores.
    out_ref[...] = jnp.broadcast_to(partial, (8, 128))


# ----------------------------------------------------------------------------
# Tiling helpers.
# ----------------------------------------------------------------------------
def _round_up(x, m):
    return ((x + m - 1) // m) * m


def _vmem_budget_bytes():
    # Stay well under every generation's scoped-VMEM default
    # (v5e: 16 MiB scoped / 128 MiB phys; v6e: 32/128; v7x: 32/64).
    budget = 12 * 1024 * 1024
    try:
        cap = int(getattr(pltpu.get_tpu_info(), "vmem_capacity_bytes", 0) or 0)
        if cap:
            budget = max(budget, min(cap // 6, 20 * 1024 * 1024))
    except Exception:  # interpret mode / query unsupported
        pass
    return budget


def _choose_tile(b, d, itemsize):
    d_lanes = _round_up(max(d, 1), 128)          # lane-padded VMEM width
    budget = _vmem_budget_bytes()
    tile = 128
    for cand in (512, 384, 256, 128):
        stream = 2 * 2 * cand * d_lanes * itemsize   # 2 streams x 2 pipeline bufs
        inter = 8 * cand * cand * 4                  # gram/d2/masks/per-pair f32 tiles
        if stream + inter <= budget:
            tile = cand
            break
    # Don't pad a small batch past a single tile's worth of waste.
    tile = min(tile, _round_up(b, 128))
    # v7x megacore: keep >= 2 tiles per parallel axis when the batch allows it.
    if tile > 128 and _round_up(b, tile) // tile < 2:
        tile = max(128, _round_up(_round_up(b, 2) // 2, 128))
    return tile


# ----------------------------------------------------------------------------
# Wrapper: OnlineContrastiveLoss.forward (all-pairs selector), fully jittable.
# ----------------------------------------------------------------------------
@functools.partial(jax.jit, static_argnames=("margin", "tile"))
def online_contrastive_loss(embeddings, target, *, margin, tile=None):
    b, d = embeddings.shape
    num_pairs = b * (b - 1) // 2
    if num_pairs == 0:
        return jnp.zeros((), jnp.float32)

    itemsize = jnp.dtype(embeddings.dtype).itemsize
    if tile is None:
        tile = _choose_tile(b, d, itemsize)
    else:
        tile = max(128, _round_up(int(tile), 128))

    b_pad = _round_up(b, tile)
    labels = target.astype(jnp.int32)
    if b_pad != b:
        emb_p = jnp.pad(embeddings, ((0, b_pad - b), (0, 0)))
        lab_p = jnp.pad(labels, (0, b_pad - b))
    else:
        emb_p, lab_p = embeddings, labels

    # O(B*D) squared norms in f32 (padded rows are zero -> norm 0, masked anyway).
    sq = jnp.sum(jnp.square(emb_p.astype(jnp.float32)), axis=-1)
    sq_col, sq_row = sq[:, None], sq[None, :]
    lab_col, lab_row = lab_p[:, None], lab_p[None, :]

    ni = nj = b_pad // tile
    precision = (jax.lax.Precision.HIGHEST
                 if jnp.dtype(embeddings.dtype) == jnp.float32
                 else jax.lax.Precision.DEFAULT)

    kernel = functools.partial(
        _pair_loss_kernel, margin=float(margin), batch=b, tile=tile,
        precision=precision)

    partials = pl.pallas_call(
        kernel,
        out_shape=jax.ShapeDtypeStruct((ni * 8, nj * 128), jnp.float32),
        grid_spec=pltpu.PrefetchScalarGridSpec(
            num_scalar_prefetch=0,
            grid=(ni, nj),
            in_specs=[
                pl.BlockSpec((tile, d), lambda i, j: (i, 0)),   # E row block
                pl.BlockSpec((tile, d), lambda i, j: (j, 0)),   # E col block
                pl.BlockSpec((tile, 1), lambda i, j: (i, 0)),   # ||e_i||^2
                pl.BlockSpec((1, tile), lambda i, j: (0, j)),   # ||e_j||^2
                pl.BlockSpec((tile, 1), lambda i, j: (i, 0)),   # labels (rows)
                pl.BlockSpec((1, tile), lambda i, j: (0, j)),   # labels (cols)
            ],
            out_specs=pl.BlockSpec((8, 128), lambda i, j: (i, j)),
        ),
        compiler_params=pltpu.CompilerParams(
            dimension_semantics=("parallel", "parallel"),
            vmem_limit_bytes=32 * 1024 * 1024,
        ),
    )(emb_p, emb_p, sq_col, sq_row, lab_col, lab_row)

    total = jnp.sum(partials.reshape(ni, 8, nj, 128)[:, 0, :, 0])
    # Divide by the TRUE number of (upper-triangle) pairs.
    return total / jnp.float32(num_pairs)


# ----------------------------------------------------------------------------
# Pure-JAX reference (mirrors the PyTorch forward with the all-pairs selector).
# ----------------------------------------------------------------------------
def _all_pairs(target):
    b = target.shape[0]
    i, j = jnp.triu_indices(b, k=1)
    same = target[i] == target[j]
    pos_pairs = jnp.stack([i[same], j[same]], axis=1)
    neg_pairs = jnp.stack([i[~same], j[~same]], axis=1)
    return pos_pairs, neg_pairs


def _reference(embeddings, target, margin):
    pos_pairs, neg_pairs = _all_pairs(target)
    e = embeddings.astype(jnp.float32)
    pos_loss = jnp.sum((e[pos_pairs[:, 0]] - e[pos_pairs[:, 1]]) ** 2, axis=1)
    neg_d2 = jnp.sum((e[neg_pairs[:, 0]] - e[neg_pairs[:, 1]]) ** 2, axis=1)
    neg_loss = jnp.maximum(margin - jnp.sqrt(neg_d2), 0.0) ** 2
    return jnp.mean(jnp.concatenate([pos_loss, neg_loss], axis=0))


if __name__ == "__main__":
    key = jax.random.PRNGKey(0)
    k1, k2, k3, k4 = jax.random.split(key, 4)

    # Small case: single padded tile, f32.
    B, D = 16, 32
    emb = jax.random.normal(k1, (B, D), dtype=jnp.float32)
    tgt = jax.random.bernoulli(k2, 0.5, (B,)).astype(jnp.int32)
    ref = _reference(emb, tgt, 1.0)
    out = jax.block_until_ready(online_contrastive_loss(emb, tgt, margin=1.0))
    assert jnp.allclose(out, ref, rtol=1e-4, atol=1e-4), (out, ref)

    # Larger, non-tile-multiple batch: exercises the 2x2 grid, the ragged
    # row/col masking, and the hinge branch (margin near typical distances).
    B2, D2 = 200, 96
    emb2 = jax.random.normal(k3, (B2, D2), dtype=jnp.float32)
    tgt2 = jax.random.bernoulli(k4, 0.5, (B2,)).astype(jnp.int32)
    ref2 = _reference(emb2, tgt2, 14.0)
    out2 = jax.block_until_ready(
        online_contrastive_loss(emb2, tgt2, margin=14.0, tile=128))
    assert jnp.allclose(out2, ref2, rtol=1e-4, atol=1e-4), (out2, ref2)

    # bf16 embeddings stream through the MXU natively (f32 accumulation).
    emb_bf16 = emb2.astype(jnp.bfloat16)
    ref_bf16 = _reference(emb_bf16.astype(jnp.float32), tgt2, 14.0)
    out_bf16 = jax.block_until_ready(
        online_contrastive_loss(emb_bf16, tgt2, margin=14.0, tile=128))
    assert jnp.allclose(out_bf16, ref_bf16, rtol=2e-3, atol=2e-3), (out_bf16, ref_bf16)

    print("KERNEL_OK")
</pallas_src>

<mosaic_0001>
module attributes {stable_mosaic.version = 11 : i64} {
  func.func @_pair_loss_kernel(%arg0: i32, %arg1: i32, %arg2: memref<128x32xf32, #tpu.memory_space<vmem>>, %arg3: memref<128x32xf32, #tpu.memory_space<vmem>>, %arg4: memref<128x1xf32, #tpu.memory_space<vmem>>, %arg5: memref<1x128xf32, #tpu.memory_space<vmem>>, %arg6: memref<128x1xi32, #tpu.memory_space<vmem>>, %arg7: memref<1x128xi32, #tpu.memory_space<vmem>>, %arg8: memref<8x128xf32, #tpu.memory_space<vmem>>) attributes {dimension_semantics = [#tpu.dimension_semantics<parallel>, #tpu.dimension_semantics<parallel>], iteration_bounds = array<i64: 1, 1>, scalar_prefetch = 0 : i64, scratch_operands = 0 : i64, tpu.core_type = #tpu.core_type<tc>, window_params = [{transform_indices = @transform_0, window_bounds = array<i64: 128, 32>}, {transform_indices = @transform_1, window_bounds = array<i64: 128, 32>}, {transform_indices = @transform_2, window_bounds = array<i64: 128, 1>}, {transform_indices = @transform_3, window_bounds = array<i64: 1, 128>}, {transform_indices = @transform_4, window_bounds = array<i64: 128, 1>}, {transform_indices = @transform_5, window_bounds = array<i64: 1, 128>}, {transform_indices = @transform_6, window_bounds = array<i64: 8, 128>}]} {
    %c0 = arith.constant 0 : index
    %c0_0 = arith.constant 0 : index
    %0 = vector.load %arg2[%c0, %c0_0] : memref<128x32xf32, #tpu.memory_space<vmem>>, vector<128x32xf32>
    %c0_1 = arith.constant 0 : index
    %c0_2 = arith.constant 0 : index
    %1 = vector.load %arg3[%c0_1, %c0_2] : memref<128x32xf32, #tpu.memory_space<vmem>>, vector<128x32xf32>
    %cst = arith.constant dense<0.000000e+00> : vector<128x128xf32>
    %2 = tpu.matmul %0, %1, %cst {dimension_numbers = #tpu.dot_dimension_numbers<[1], [1], [0], [0], [0, 0, 1, 0], [], []>, precision = #tpu.contract_precision<fp32>} : vector<128x32xf32>, vector<128x32xf32>, vector<128x128xf32> -> vector<128x128xf32>
    %c0_3 = arith.constant 0 : index
    %c0_4 = arith.constant 0 : index
    %3 = vector.load %arg4[%c0_3, %c0_4] : memref<128x1xf32, #tpu.memory_space<vmem>>, vector<128x1xf32>
    %c0_5 = arith.constant 0 : index
    %c0_6 = arith.constant 0 : index
    %4 = vector.load %arg5[%c0_5, %c0_6] : memref<1x128xf32, #tpu.memory_space<vmem>>, vector<1x128xf32>
    %5 = vector.broadcast %3 : vector<128x1xf32> to vector<128x128xf32>
    %6 = vector.broadcast %4 : vector<1x128xf32> to vector<128x128xf32>
    %7 = arith.addf %5, %6 : vector<128x128xf32>
    %cst_7 = arith.constant 2.000000e+00 : f32
    %8 = vector.broadcast %cst_7 : f32 to vector<128x128xf32>
    %9 = arith.mulf %8, %2 : vector<128x128xf32>
    %10 = arith.subf %7, %9 : vector<128x128xf32>
    %cst_8 = arith.constant 0.000000e+00 : f32
    %11 = vector.broadcast %cst_8 : f32 to vector<128x128xf32>
    %12 = arith.maximumf %10, %11 : vector<128x128xf32>
    %c128_i32 = arith.constant 128 : i32
    %13 = arith.muli %arg0, %c128_i32 : i32
    %14 = tpu.iota {dimensions = array<i32: 0>} : vector<128x128xi32>
    %15 = vector.broadcast %13 : i32 to vector<128x128xi32>
    %16 = arith.addi %15, %14 : vector<128x128xi32>
    %c128_i32_9 = arith.constant 128 : i32
    %17 = arith.muli %arg1, %c128_i32_9 : i32
    %18 = tpu.iota {dimensions = array<i32: 1>} : vector<128x128xi32>
    %19 = vector.broadcast %17 : i32 to vector<128x128xi32>
    %20 = arith.addi %19, %18 : vector<128x128xi32>
    %c16_i32 = arith.constant 16 : i32
    %21 = vector.broadcast %c16_i32 : i32 to vector<128x128xi32>
    %22 = arith.cmpi slt, %16, %21 : vector<128x128xi32>
    %c16_i32_10 = arith.constant 16 : i32
    %23 = vector.broadcast %c16_i32_10 : i32 to vector<128x128xi32>
    %24 = arith.cmpi slt, %20, %23 : vector<128x128xi32>
    %25 = arith.andi %22, %24 : vector<128x128xi1>
    %26 = arith.cmpi slt, %16, %20 : vector<128x128xi32>
    %27 = arith.andi %25, %26 : vector<128x128xi1>
    %c0_11 = arith.constant 0 : index
    %c0_12 = arith.constant 0 : index
    %28 = vector.load %arg6[%c0_11, %c0_12] : memref<128x1xi32, #tpu.memory_space<vmem>>, vector<128x1xi32>
    %c0_13 = arith.constant 0 : index
    %c0_14 = arith.constant 0 : index
    %29 = vector.load %arg7[%c0_13, %c0_14] : memref<1x128xi32, #tpu.memory_space<vmem>>, vector<1x128xi32>
    %30 = vector.broadcast %28 : vector<128x1xi32> to vector<128x128xi32>
    %31 = vector.broadcast %29 : vector<1x128xi32> to vector<128x128xi32>
    %32 = arith.cmpi eq, %30, %31 : vector<128x128xi32>
    %33 = math.sqrt %12 : vector<128x128xf32>
    %cst_15 = arith.constant 1.000000e+00 : f32
    %34 = vector.broadcast %cst_15 : f32 to vector<128x128xf32>
    %35 = arith.subf %34, %33 : vector<128x128xf32>
    %cst_16 = arith.constant 0.000000e+00 : f32
    %36 = vector.broadcast %cst_16 : f32 to vector<128x128xf32>
    %37 = arith.maximumf %35, %36 : vector<128x128xf32>
    %38 = arith.mulf %37, %37 : vector<128x128xf32>
    %39 = arith.select %32, %12, %38 : vector<128x128xi1>, vector<128x128xf32>
    %cst_17 = arith.constant 0.000000e+00 : f32
    %40 = vector.broadcast %cst_17 : f32 to vector<128x128xf32>
    %41 = arith.select %27, %39, %40 : vector<128x128xi1>, vector<128x128xf32>
    %42 = vector.shape_cast %41 : vector<128x128xf32> to vector<1x128x128xf32>
    %cst_18 = arith.constant dense<0.000000e+00> : vector<1xf32>
    %43 = vector.multi_reduction <add>, %42, %cst_18 [1, 2] : vector<1x128x128xf32> to vector<1xf32>
    %44 = vector.shape_cast %43 : vector<1xf32> to vector<1x1x1xf32>
    %45 = vector.extract %44[0, 0, 0] : f32 from vector<1x1x1xf32>
    %46 = vector.broadcast %45 : f32 to vector<1x1xf32>
    %47 = vector.shape_cast %46 : vector<1x1xf32> to vector<1x1xf32>
    %48 = vector.broadcast %47 : vector<1x1xf32> to vector<8x128xf32>
    %c0_19 = arith.constant 0 : index
    %c0_20 = arith.constant 0 : index
    %49 = vector.load %arg8[%c0_19, %c0_20] : memref<8x128xf32, #tpu.memory_space<vmem>>, vector<8x128xf32>
    tpu.vector_store %arg8[%c0_19, %c0_20], %48 {strides = array<i32>} : memref<8x128xf32, #tpu.memory_space<vmem>>, vector<8x128xf32>,
    return
  }
  func.func @transform_0(%arg0: i32, %arg1: i32) -> (i32, i32) {
    %c0_i32 = arith.constant 0 : i32
    %c0_i32_0 = arith.constant 0 : i32
    return %arg0, %c0_i32 : i32, i32
  }
  func.func @transform_1(%arg0: i32, %arg1: i32) -> (i32, i32) {
    %c0_i32 = arith.constant 0 : i32
    %c0_i32_0 = arith.constant 0 : i32
    return %arg1, %c0_i32 : i32, i32
  }
  func.func @transform_2(%arg0: i32, %arg1: i32) -> (i32, i32) {
    %c0_i32 = arith.constant 0 : i32
    %c0_i32_0 = arith.constant 0 : i32
    return %arg0, %c0_i32 : i32, i32
  }
  func.func @transform_3(%arg0: i32, %arg1: i32) -> (i32, i32) {
    %c0_i32 = arith.constant 0 : i32
    %c0_i32_0 = arith.constant 0 : i32
    return %c0_i32, %arg1 : i32, i32
  }
  func.func @transform_4(%arg0: i32, %arg1: i32) -> (i32, i32) {
    %c0_i32 = arith.constant 0 : i32
    %c0_i32_0 = arith.constant 0 : i32
    return %arg0, %c0_i32 : i32, i32
  }
  func.func @transform_5(%arg0: i32, %arg1: i32) -> (i32, i32) {
    %c0_i32 = arith.constant 0 : i32
    %c0_i32_0 = arith.constant 0 : i32
    return %c0_i32, %arg1 : i32, i32
  }
  func.func @transform_6(%arg0: i32, %arg1: i32) -> (i32, i32) {
    %c0_i32 = arith.constant 0 : i32
    return %arg0, %arg1 : i32, i32
  }
}

</mosaic_0001>

<llo_original>
// kernel: online_contrastive_loss.1
$region0: #{online_contrastive_loss.1}
  #allocation0 [shape = 'u32[]', space=smem, size = 0x4, offset = 0x4, fixed_abs, tag = 'smem constant byte address 0x4 - core index']
  #allocation1 [shape = 'u32[144,128]{1,0:T(1,128)}', space=vmem, size = 0x12000, scoped, tag = 'internal scratch']
  %s0 = inlined_call_operand.vmem [shape: f32[128,32], index: 0, kind: input, shape index: {}, may-alias: {0,1}]
  %s1 = inlined_call_operand.vmem [shape: f32[128,32], index: 1, kind: input, shape index: {}, may-alias: {0,1}]
  %s2 = inlined_call_operand.vmem [shape: f32[128,1], index: 2, kind: input, shape index: {}]
  %s3 = inlined_call_operand.vmem [shape: f32[1,128], index: 3, kind: input, shape index: {}]
  %s4 = inlined_call_operand.vmem [shape: s32[128,1], index: 4, kind: input, shape index: {}]
  %s5 = inlined_call_operand.vmem [shape: s32[1,128], index: 5, kind: input, shape index: {}]
  %s6 = inlined_call_operand.vmem [shape: f32[8,128], index: 6, kind: output, shape index: {}]
  %s7 = sld [smem:[#allocation0]]
  $region34: #{online_contrastive_loss.1} parent=0
    _
  %s9 = ssub.s32 1, %s7
  %s10 = scalar_select 0, %s9, %s7
  // Predicated region
  $region2: #{online_contrastive_loss.1} parent=0 // pred_check
    _
  $region3: #{online_contrastive_loss.1} parent=0 // pred_check_branch
    %12 = sbr.rel (0) target = $region5
  $region4: #{online_contrastive_loss.1} parent=0 // pred_region
    _
  $region5: #{online_contrastive_loss.1} parent=0 // pred_fallthru
    _
  // Predicated region
  $region6: #{online_contrastive_loss.1} parent=0 // pred_check
    _
  $region7: #{online_contrastive_loss.1} parent=0 // pred_check_branch
    %14 = sbr.rel (0) target = $region9
  $region8: #{online_contrastive_loss.1} parent=0 // pred_region
    _
  $region9: #{online_contrastive_loss.1} parent=0 // pred_fallthru
    _
  // Predicated region
  $region10: #{online_contrastive_loss.1} parent=0 // pred_check
    _
  $region11: #{online_contrastive_loss.1} parent=0 // pred_check_branch
    %16 = sbr.rel (0) target = $region13
  $region12: #{online_contrastive_loss.1} parent=0 // pred_region
    _
  $region13: #{online_contrastive_loss.1} parent=0 // pred_fallthru
    _
  // Predicated region
  $region14: #{online_contrastive_loss.1} parent=0 // pred_check
    _
  $region15: #{online_contrastive_loss.1} parent=0 // pred_check_branch
    %18 = sbr.rel (0) target = $region17
  $region16: #{online_contrastive_loss.1} parent=0 // pred_region
    _
  $region17: #{online_contrastive_loss.1} parent=0 // pred_fallthru
    _
  // Predicated region
  $region18: #{online_contrastive_loss.1} parent=0 // pred_check
    _
  $region19: #{online_contrastive_loss.1} parent=0 // pred_check_branch
    %20 = sbr.rel (0) target = $region21
  $region20: #{online_contrastive_loss.1} parent=0 // pred_region
    _
  $region21: #{online_contrastive_loss.1} parent=0 // pred_fallthru
    _
  // Predicated region
  $region22: #{online_contrastive_loss.1} parent=0 // pred_check
    _
  $region23: #{online_contrastive_loss.1} parent=0 // pred_check_branch
    %22 = sbr.rel (0) target = $region25
  $region24: #{online_contrastive_loss.1} parent=0 // pred_region
    _
  $region25: #{online_contrastive_loss.1} parent=0 // pred_fallthru
    _
  %v23 = vld [vmem:[%s0] sm:$0xff]
  %v24 = vld [vmem:[%s0 + $0x8] sm:$0xff]
  %v25 = vld [vmem:[%s0 + $0x10] sm:$0xff]
  %v26 = vld [vmem:[%s0 + $0x18] sm:$0xff]
  %v27 = vld [vmem:[%s0 + $0x20] sm:$0xff]
  %v28 = vld [vmem:[%s0 + $0x28] sm:$0xff]
  %v29 = vld [vmem:[%s0 + $0x30] sm:$0xff]
  %v30 = vld [vmem:[%s0 + $0x38] sm:$0xff]
  %v31 = vld [vmem:[%s0 + $0x40] sm:$0xff]
  %v32 = vld [vmem:[%s0 + $0x48] sm:$0xff]
  %v33 = vld [vmem:[%s0 + $0x50] sm:$0xff]
  %v34 = vld [vmem:[%s0 + $0x58] sm:$0xff]
  %v35 = vld [vmem:[%s0 + $0x60] sm:$0xff]
  %v36 = vld [vmem:[%s0 + $0x68] sm:$0xff]
  %v37 = vld [vmem:[%s0 + $0x70] sm:$0xff]
  %v38 = vld [vmem:[%s0 + $0x78] sm:$0xff]
  %v39 = vld [vmem:[%s1] sm:$0xff]
  %v40 = vld [vmem:[%s1 + $0x8] sm:$0xff]
  %v41 = vld [vmem:[%s1 + $0x10] sm:$0xff]
  %v42 = vld [vmem:[%s1 + $0x18] sm:$0xff]
  %v43 = vld [vmem:[%s1 + $0x20] sm:$0xff]
  %v44 = vld [vmem:[%s1 + $0x28] sm:$0xff]
  %v45 = vld [vmem:[%s1 + $0x30] sm:$0xff]
  %v46 = vld [vmem:[%s1 + $0x38] sm:$0xff]
  %v47 = vld [vmem:[%s1 + $0x40] sm:$0xff]
  %v48 = vld [vmem:[%s1 + $0x48] sm:$0xff]
  %v49 = vld [vmem:[%s1 + $0x50] sm:$0xff]
  %v50 = vld [vmem:[%s1 + $0x58] sm:$0xff]
  %v51 = vld [vmem:[%s1 + $0x60] sm:$0xff]
  %v52 = vld [vmem:[%s1 + $0x68] sm:$0xff]
  %v53 = vld [vmem:[%s1 + $0x70] sm:$0xff]
  %v54 = vld [vmem:[%s1 + $0x78] sm:$0xff]
  %vm55 = vcmask 261120
  %v57 = vsel %vm55, %v23, 0
  %v60 = vsel %vm55, %v24, 0
  %v63 = vsel %vm55, %v25, 0
  %v66 = vsel %vm55, %v26, 0
  %v69 = vsel %vm55, %v27, 0
  %v72 = vsel %vm55, %v28, 0
  %v75 = vsel %vm55, %v29, 0
  %v78 = vsel %vm55, %v30, 0
  %v81 = vsel %vm55, %v31, 0
  %v84 = vsel %vm55, %v32, 0
  %v87 = vsel %vm55, %v33, 0
  %v90 = vsel %vm55, %v34, 0
  %v93 = vsel %vm55, %v35, 0
  %v96 = vsel %vm55, %v36, 0
  %v99 = vsel %vm55, %v37, 0
  %v102 = vsel %vm55, %v38, 0
  %v105 = vsel %vm55, %v39, 0
  %v108 = vsel %vm55, %v40, 0
  %v111 = vsel %vm55, %v41, 0
  %v114 = vsel %vm55, %v42, 0
  %v117 = vsel %vm55, %v43, 0
  %v120 = vsel %vm55, %v44, 0
  %v123 = vsel %vm55, %v45, 0
  %v126 = vsel %vm55, %v46, 0
  %v129 = vsel %vm55, %v47, 0
  %v132 = vsel %vm55, %v48, 0
  %v135 = vsel %vm55, %v49, 0
  %v138 = vsel %vm55, %v50, 0
  %v141 = vsel %vm55, %v51, 0
  %v144 = vsel %vm55, %v52, 0
  %v147 = vsel %vm55, %v53, 0
  %v150 = vsel %vm55, %v54, 0
  %152 = vmatprep.subr.mxu0 0.0
  %v153 = vand.u32 %v150, 4294901760
  %154 = vmatpush1.xpose.msra.mxu0 %v153
  %155 = vmatprep.subr.mxu0 0.0
  %v156 = vand.u32 %v147, 4294901760
  %157 = vmatpush1.xpose.msra.mxu0 %v156
  %158 = vmatprep.subr.mxu0 0.0
  %v159 = vand.u32 %v144, 4294901760
  %160 = vmatpush1.xpose.msra.mxu0 %v159
  %161 = vmatprep.subr.mxu0 0.0
  %v162 = vand.u32 %v141, 4294901760
  %163 = vmatpush1.xpose.msra.mxu0 %v162
  %164 = vmatprep.subr.mxu0 0.0
  %v165 = vand.u32 %v138, 4294901760
  %166 = vmatpush1.xpose.msra.mxu0 %v165
  %167 = vmatprep.subr.mxu0 0.0
  %v168 = vand.u32 %v135, 4294901760
  %169 = vmatpush1.xpose.msra.mxu0 %v168
  %170 = vmatprep.subr.mxu0 0.0
  %v171 = vand.u32 %v132, 4294901760
  %172 = vmatpush1.xpose.msra.mxu0 %v171
  %173 = vmatprep.subr.mxu0 0.0
  %v174 = vand.u32 %v129, 4294901760
  %175 = vmatpush1.xpose.msra.mxu0 %v174
  %176 = vmatprep.subr.mxu0 0.0
  %v177 = vand.u32 %v126, 4294901760
  %178 = vmatpush1.xpose.msra.mxu0 %v177
  %179 = vmatprep.subr.mxu0 0.0
  %v180 = vand.u32 %v123, 4294901760
  %181 = vmatpush1.xpose.msra.mxu0 %v180
  %182 = vmatprep.subr.mxu0 0.0
  %v183 = vand.u32 %v120, 4294901760
  %184 = vmatpush1.xpose.msra.mxu0 %v183
  %185 = vmatprep.subr.mxu0 0.0
  %v186 = vand.u32 %v117, 4294901760
  %187 = vmatpush1.xpose.msra.mxu0 %v186
  %188 = vmatprep.subr.mxu0 0.0
  %v189 = vand.u32 %v114, 4294901760
  %190 = vmatpush1.xpose.msra.mxu0 %v189
  %191 = vmatprep.subr.mxu0 0.0
  %v192 = vand.u32 %v111, 4294901760
  %193 = vmatpush1.xpose.msra.mxu0 %v192
  %194 = vmatprep.subr.mxu0 0.0
  %v195 = vand.u32 %v108, 4294901760
  %196 = vmatpush1.xpose.msra.mxu0 %v195
  %197 = vmatprep.subr.mxu0 0.0
  %v198 = vand.u32 %v105, 4294901760
  %199 = vmatpush1.xpose.msra.mxu0 %v198
  %200 = vmatprep.subr.mxu0 0.0
  %201 = vmatpush2.xpose.msra.mxu0 0.0
  %202 = vmatprep.subr.mxu0 0.0
  %203 = vmatpush2.xpose.msra.mxu0 0.0
  %204 = vmatprep.subr.mxu0 0.0
  %205 = vmatpush2.xpose.msra.mxu0 0.0
  %206 = vmatprep.subr.mxu0 0.0
  %207 = vmatpush2.xpose.msra.mxu0 0.0
  %208 = vmatprep.subr.mxu0 0.0
  %209 = vmatpush2.xpose.msra.mxu0 0.0
  %210 = vmatprep.subr.mxu0 0.0
  %211 = vmatpush2.xpose.msra.mxu0 0.0
  %212 = vmatprep.subr.mxu0 0.0
  %213 = vmatpush2.xpose.msra.mxu0 0.0
  %214 = vmatprep.subr.mxu0 0.0
  %215 = vmatpush2.xpose.msra.mxu0 0.0
  %216 = vmatprep.subr.mxu0 0.0
  %217 = vmatpush2.xpose.msra.mxu0 0.0
  %218 = vmatprep.subr.mxu0 0.0
  %219 = vmatpush2.xpose.msra.mxu0 0.0
  %220 = vmatprep.subr.mxu0 0.0
  %221 = vmatpush2.xpose.msra.mxu0 0.0
  %222 = vmatprep.subr.mxu0 0.0
  %223 = vmatpush2.xpose.msra.mxu0 0.0
  %224 = vmatprep.subr.mxu0 0.0
  %225 = vmatpush2.xpose.msra.mxu0 0.0
  %226 = vmatprep.subr.mxu0 0.0
  %227 = vmatpush2.xpose.msra.mxu0 0.0
  %228 = vmatprep.subr.mxu0 0.0
  %229 = vmatpush2.xpose.msra.mxu0 0.0
  %230 = vmatprep.subr.mxu0 0.0
  %231 = vmatpush2.xpose.msra.mxu0 0.0
  %232 = vmatprep.mubr.f32.mxu0 0.0
  %v233 = vand.u32 %v57, 4294901760
  %v234 = vsub.f32 %v57, %v233
  %v235 = vand.u32 %v234, 4294901760
  %v236 = vsub.f32 %v234, %v235
  %v237 = vand.u32 %v236, 4294901760
  %238 = vmatmul.mubr.f32.gmra.mxu0 %v237
  %v239 = vpop.f32.mrf.mxu0
  %v240 = vadd.f32 0.0, %v239
  %v241 = vpop.f32.mrf.mxu0
  %242 = vmatprep.mubr.f32.mxu0 0.0
  %v243 = vand.u32 %v60, 4294901760
  %v244 = vsub.f32 %v60, %v243
  %v245 = vand.u32 %v244, 4294901760
  %v246 = vsub.f32 %v244, %v245
  %v247 = vand.u32 %v246, 4294901760
  %248 = vmatmul.mubr.f32.gmra.mxu0 %v247
  %v249 = vpop.f32.mrf.mxu0
  %v250 = vadd.f32 0.0, %v249
  %v251 = vpop.f32.mrf.mxu0
  %252 = vmatprep.mubr.f32.mxu0 0.0
  %v253 = vand.u32 %v63, 4294901760
  %v254 = vsub.f32 %v63, %v253
  %v255 = vand.u32 %v254, 4294901760
  %v256 = vsub.f32 %v254, %v255
  %v257 = vand.u32 %v256, 4294901760
  %258 = vmatmul.mubr.f32.gmra.mxu0 %v257
  %v259 = vpop.f32.mrf.mxu0
  %v260 = vadd.f32 0.0, %v259
  %v261 = vpop.f32.mrf.mxu0
  %262 = vmatprep.mubr.f32.mxu0 0.0
  %v263 = vand.u32 %v66, 4294901760
  %v264 = vsub.f32 %v66, %v263
  %v265 = vand.u32 %v264, 4294901760
  %v266 = vsub.f32 %v264, %v265
  %v267 = vand.u32 %v266, 4294901760
  %268 = vmatmul.mubr.f32.gmra.mxu0 %v267
  %v269 = vpop.f32.mrf.mxu0
  %v270 = vadd.f32 0.0, %v269
  %v271 = vpop.f32.mrf.mxu0
  %272 = vmatprep.mubr.f32.mxu0 0.0
  %v273 = vand.u32 %v69, 4294901760
  %v274 = vsub.f32 %v69, %v273
  %v275 = vand.u32 %v274, 4294901760
  %v276 = vsub.f32 %v274, %v275
  %v277 = vand.u32 %v276, 4294901760
  %278 = vmatmul.mubr.f32.gmra.mxu0 %v277
  %v279 = vpop.f32.mrf.mxu0
  %v280 = vadd.f32 0.0, %v279
  %v281 = vpop.f32.mrf.mxu0
  %282 = vmatprep.mubr.f32.mxu0 0.0
  %v283 = vand.u32 %v72, 4294901760
  %v284 = vsub.f32 %v72, %v283
  %v285 = vand.u32 %v284, 4294901760
  %v286 = vsub.f32 %v284, %v285
  %v287 = vand.u32 %v286, 4294901760
  %288 = vmatmul.mubr.f32.gmra.mxu0 %v287
  %v289 = vpop.f32.mrf.mxu0
  %v290 = vadd.f32 0.0, %v289
  %v291 = vpop.f32.mrf.mxu0
  %292 = vmatprep.mubr.f32.mxu0 0.0
  %v293 = vand.u32 %v75, 4294901760
  %v294 = vsub.f32 %v75, %v293
  %v295 = vand.u32 %v294, 4294901760
  %v296 = vsub.f32 %v294, %v295
  %v297 = vand.u32 %v296, 4294901760
  %298 = vmatmul.mubr.f32.gmra.mxu0 %v297
  %v299 = vpop.f32.mrf.mxu0
  %v300 = vadd.f32 0.0, %v299
  %v301 = vpop.f32.mrf.mxu0
  %302 = vmatprep.mubr.f32.mxu0 0.0
  %v303 = vand.u32 %v78, 4294901760
  %v304 = vsub.f32 %v78, %v303
  %v305 = vand.u32 %v304, 4294901760
  %v306 = vsub.f32 %v304, %v305
  %v307 = vand.u32 %v306, 4294901760
  %308 = vmatmul.mubr.f32.gmra.mxu0 %v307
  %v309 = vpop.f32.mrf.mxu0
  %v310 = vadd.f32 0.0, %v309
  %v311 = vpop.f32.mrf.mxu0
  %312 = vmatprep.mubr.f32.mxu0 0.0
  %v313 = vand.u32 %v81, 4294901760
  %v314 = vsub.f32 %v81, %v313
  %v315 = vand.u32 %v314, 4294901760
  %v316 = vsub.f32 %v314, %v315
  %v317 = vand.u32 %v316, 4294901760
  %318 = vmatmul.mubr.f32.gmra.mxu0 %v317
  %v319 = vpop.f32.mrf.mxu0
  %v320 = vadd.f32 0.0, %v319
  %v321 = vpop.f32.mrf.mxu0
  %322 = vmatprep.mubr.f32.mxu0 0.0
  %v323 = vand.u32 %v84, 4294901760
  %v324 = vsub.f32 %v84, %v323
  %v325 = vand.u32 %v324, 4294901760
  %v326 = vsub.f32 %v324, %v325
  %v327 = vand.u32 %v326, 4294901760
  %328 = vmatmul.mubr.f32.gmra.mxu0 %v327
  %v329 = vpop.f32.mrf.mxu0
  %v330 = vadd.f32 0.0, %v329
  %v331 = vpop.f32.mrf.mxu0
  %332 = vmatprep.mubr.f32.mxu0 0.0
  %v333 = vand.u32 %v87, 4294901760
  %v334 = vsub.f32 %v87, %v333
  %v335 = vand.u32 %v334, 4294901760
  %v336 = vsub.f32 %v334, %v335
  %v337 = vand.u32 %v336, 4294901760
  %338 = vmatmul.mubr.f32.gmra.mxu0 %v337
  %v339 = vpop.f32.mrf.mxu0
  %v340 = vadd.f32 0.0, %v339
  %v341 = vpop.f32.mrf.mxu0
  %342 = vmatprep.mubr.f32.mxu0 0.0
  %v343 = vand.u32 %v90, 4294901760
  %v344 = vsub.f32 %v90, %v343
  %v345 = vand.u32 %v344, 4294901760
  %v346 = vsub.f32 %v344, %v345
  %v347 = vand.u32 %v346, 4294901760
  %348 = vmatmul.mubr.f32.gmra.mxu0 %v347
  %v349 = vpop.f32.mrf.mxu0
  %v350 = vadd.f32 0.0, %v349
  %v351 = vpop.f32.mrf.mxu0
  %352 = vmatprep.mubr.f32.mxu0 0.0
  %v353 = vand.u32 %v93, 4294901760
  %v354 = vsub.f32 %v93, %v353
  %v355 = vand.u32 %v354, 4294901760
  %v356 = vsub.f32 %v354, %v355
  %v357 = vand.u32 %v356, 4294901760
  %358 = vmatmul.mubr.f32.gmra.mxu0 %v357
  %v359 = vpop.f32.mrf.mxu0
  %v360 = vadd.f32 0.0, %v359
  %v361 = vpop.f32.mrf.mxu0
  %362 = vmatprep.mubr.f32.mxu0 0.0
  %v363 = vand.u32 %v96, 4294901760
  %v364 = vsub.f32 %v96, %v363
  %v365 = vand.u32 %v364, 4294901760
  %v366 = vsub.f32 %v364, %v365
  %v367 = vand.u32 %v366, 4294901760
  %368 = vmatmul.mubr.f32.gmra.mxu0 %v367
  %v369 = vpop.f32.mrf.mxu0
  %v370 = vadd.f32 0.0, %v369
  %v371 = vpop.f32.mrf.mxu0
  %372 = vmatprep.mubr.f32.mxu0 0.0
  %v373 = vand.u32 %v99, 4294901760
  %v374 = vsub.f32 %v99, %v373
  %v375 = vand.u32 %v374, 4294901760
  %v376 = vsub.f32 %v374, %v375
  %v377 = vand.u32 %v376, 4294901760
  %378 = vmatmul.mubr.f32.gmra.mxu0 %v377
  %v379 = vpop.f32.mrf.mxu0
  %v380 = vadd.f32 0.0, %v379
  %v381 = vpop.f32.mrf.mxu0
  %382 = vmatprep.mubr.f32.mxu0 0.0
  %v383 = vand.u32 %v102, 4294901760
  %v384 = vsub.f32 %v102, %v383
  %v385 = vand.u32 %v384, 4294901760
  %v386 = vsub.f32 %v384, %v385
  %v387 = vand.u32 %v386, 4294901760
  %388 = vmatmul.mubr.f32.gmra.mxu0 %v387
  %v389 = vpop.f32.mrf.mxu0
  %v390 = vadd.f32 0.0, %v389
  %v391 = vpop.f32.mrf.mxu0
  %392 = vdwg.mxu0
  %393 = vmatprep.subr.mxu0 0.0
  %v394 = vand.u32 %v150, 4294901760
  %v395 = vsub.f32 %v150, %v394
  %v396 = vand.u32 %v395, 4294901760
  %v397 = vsub.f32 %v395, %v396
  %v398 = vand.u32 %v397, 4294901760
  %399 = vmatpush1.xpose.msra.mxu0 %v398
  %400 = vmatprep.subr.mxu0 0.0
  %v401 = vand.u32 %v147, 4294901760
  %v402 = vsub.f32 %v147, %v401
  %v403 = vand.u32 %v402, 4294901760
  %v404 = vsub.f32 %v402, %v403
  %v405 = vand.u32 %v404, 4294901760
  %406 = vmatpush1.xpose.msra.mxu0 %v405
  %407 = vmatprep.subr.mxu0 0.0
  %v408 = vand.u32 %v144, 4294901760
  %v409 = vsub.f32 %v144, %v408
  %v410 = vand.u32 %v409, 4294901760
  %v411 = vsub.f32 %v409, %v410
  %v412 = vand.u32 %v411, 4294901760
  %413 = vmatpush1.xpose.msra.mxu0 %v412
  %414 = vmatprep.subr.mxu0 0.0
  %v415 = vand.u32 %v141, 4294901760
  %v416 = vsub.f32 %v141, %v415
  %v417 = vand.u32 %v416, 4294901760
  %v418 = vsub.f32 %v416, %v417
  %v419 = vand.u32 %v418, 4294901760
  %420 = vmatpush1.xpose.msra.mxu0 %v419
  %421 = vmatprep.subr.mxu0 0.0
  %v422 = vand.u32 %v138, 4294901760
  %v423 = vsub.f32 %v138, %v422
  %v424 = vand.u32 %v423, 4294901760
  %v425 = vsub.f32 %v423, %v424
  %v426 = vand.u32 %v425, 4294901760
  %427 = vmatpush1.xpose.msra.mxu0 %v426
  %428 = vmatprep.subr.mxu0 0.0
  %v429 = vand.u32 %v135, 4294901760
  %v430 = vsub.f32 %v135, %v429
  %v431 = vand.u32 %v430, 4294901760
  %v432 = vsub.f32 %v430, %v431
  %v433 = vand.u32 %v432, 4294901760
  %434 = vmatpush1.xpose.msra.mxu0 %v433
  %435 = vmatprep.subr.mxu0 0.0
  %v436 = vand.u32 %v132, 4294901760
  %v437 = vsub.f32 %v132, %v436
  %v438 = vand.u32 %v437, 4294901760
  %v439 = vsub.f32 %v437, %v438
  %v440 = vand.u32 %v439, 4294901760
  %441 = vmatpush1.xpose.msra.mxu0 %v440
  %442 = vmatprep.subr.mxu0 0.0
  %v443 = vand.u32 %v129, 4294901760
  %v444 = vsub.f32 %v129, %v443
  %v445 = vand.u32 %v444, 4294901760
  %v446 = vsub.f32 %v444, %v445
  %v447 = vand.u32 %v446, 4294901760
  %448 = vmatpush1.xpose.msra.mxu0 %v447
  %449 = vmatprep.subr.mxu0 0.0
  %v450 = vand.u32 %v126, 4294901760
  %v451 = vsub.f32 %v126, %v450
  %v452 = vand.u32 %v451, 4294901760
  %v453 = vsub.f32 %v451, %v452
  %v454 = vand.u32 %v453, 4294901760
  %455 = vmatpush1.xpose.msra.mxu0 %v454
  %456 = vmatprep.subr.mxu0 0.0
  %v457 = vand.u32 %v123, 4294901760
  %v458 = vsub.f32 %v123, %v457
  %v459 = vand.u32 %v458, 4294901760
  %v460 = vsub.f32 %v458, %v459
  %v461 = vand.u32 %v460, 4294901760
  %462 = vmatpush1.xpose.msra.mxu0 %v461
  %463 = vmatprep.subr.mxu0 0.0
  %v464 = vand.u32 %v120, 4294901760
  %v465 = vsub.f32 %v120, %v464
  %v466 = vand.u32 %v465, 4294901760
  %v467 = vsub.f32 %v465, %v466
  %v468 = vand.u32 %v467, 4294901760
  %469 = vmatpush1.xpose.msra.mxu0 %v468
  %470 = vmatprep.subr.mxu0 0.0
  %v471 = vand.u32 %v117, 4294901760
  %v472 = vsub.f32 %v117, %v471
  %v473 = vand.u32 %v472, 4294901760
  %v474 = vsub.f32 %v472, %v473
  %v475 = vand.u32 %v474, 4294901760
  %476 = vmatpush1.xpose.msra.mxu0 %v475
  %477 = vmatprep.subr.mxu0 0.0
  %v478 = vand.u32 %v114, 4294901760
  %v479 = vsub.f32 %v114, %v478
  %v480 = vand.u32 %v479, 4294901760
  %v481 = vsub.f32 %v479, %v480
  %v482 = vand.u32 %v481, 4294901760
  %483 = vmatpush1.xpose.msra.mxu0 %v482
  %484 = vmatprep.subr.mxu0 0.0
  %v485 = vand.u32 %v111, 4294901760
  %v486 = vsub.f32 %v111, %v485
  %v487 = vand.u32 %v486, 4294901760
  %v488 = vsub.f32 %v486, %v487
  %v489 = vand.u32 %v488, 4294901760
  %490 = vmatpush1.xpose.msra.mxu0 %v489
  %491 = vmatprep.subr.mxu0 0.0
  %v492 = vand.u32 %v108, 4294901760
  %v493 = vsub.f32 %v108, %v492
  %v494 = vand.u32 %v493, 4294901760
  %v495 = vsub.f32 %v493, %v494
  %v496 = vand.u32 %v495, 4294901760
  %497 = vmatpush1.xpose.msra.mxu0 %v496
  %498 = vmatprep.subr.mxu0 0.0
  %v499 = vand.u32 %v105, 4294901760
  %v500 = vsub.f32 %v105, %v499
  %v501 = vand.u32 %v500, 4294901760
  %v502 = vsub.f32 %v500, %v501
  %v503 = vand.u32 %v502, 4294901760
  %504 = vmatpush1.xpose.msra.mxu0 %v503
  %505 = vmatprep.subr.mxu0 0.0
  %506 = vmatpush2.xpose.msra.mxu0 0.0
  %507 = vmatprep.subr.mxu0 0.0
  %508 = vmatpush2.xpose.msra.mxu0 0.0
  %509 = vmatprep.subr.mxu0 0.0
  %510 = vmatpush2.xpose.msra.mxu0 0.0
  %511 = vmatprep.subr.mxu0 0.0
  %512 = vmatpush2.xpose.msra.mxu0 0.0
  %513 = vmatprep.subr.mxu0 0.0
  %514 = vmatpush2.xpose.msra.mxu0 0.0
  %515 = vmatprep.subr.mxu0 0.0
  %516 = vmatpush2.xpose.msra.mxu0 0.0
  %517 = vmatprep.subr.mxu0 0.0
  %518 = vmatpush2.xpose.msra.mxu0 0.0
  %519 = vmatprep.subr.mxu0 0.0
  %520 = vmatpush2.xpose.msra.mxu0 0.0
  %521 = vmatprep.subr.mxu0 0.0
  %522 = vmatpush2.xpose.msra.mxu0 0.0
  %523 = vmatprep.subr.mxu0 0.0
  %524 = vmatpush2.xpose.msra.mxu0 0.0
  %525 = vmatprep.subr.mxu0 0.0
  %526 = vmatpush2.xpose.msra.mxu0 0.0
  %527 = vmatprep.subr.mxu0 0.0
  %528 = vmatpush2.xpose.msra.mxu0 0.0
  %529 = vmatprep.subr.mxu0 0.0
  %530 = vmatpush2.xpose.msra.mxu0 0.0
  %531 = vmatprep.subr.mxu0 0.0
  %532 = vmatpush2.xpose.msra.mxu0 0.0
  %533 = vmatprep.subr.mxu0 0.0
  %534 = vmatpush2.xpose.msra.mxu0 0.0
  %535 = vmatprep.subr.mxu0 0.0
  %536 = vmatpush2.xpose.msra.mxu0 0.0
  %537 = vmatprep.mubr.f32.mxu0 0.0
  %v538 = vand.u32 %v57, 4294901760
  %539 = vmatmul.mubr.f32.gmra.mxu0 %v538
  %v540 = vpop.f32.mrf.mxu0
  %v541 = vadd.f32 %v240, %v540
  %v542 = vpop.f32.mrf.mxu0
  %543 = vmatprep.mubr.f32.mxu0 0.0
  %v544 = vand.u32 %v60, 4294901760
  %545 = vmatmul.mubr.f32.gmra.mxu0 %v544
  %v546 = vpop.f32.mrf.mxu0
  %v547 = vadd.f32 %v250, %v546
  %v548 = vpop.f32.mrf.mxu0
  %549 = vmatprep.mubr.f32.mxu0 0.0
  %v550 = vand.u32 %v63, 4294901760
  %551 = vmatmul.mubr.f32.gmra.mxu0 %v550
  %v552 = vpop.f32.mrf.mxu0
  %v553 = vadd.f32 %v260, %v552
  %v554 = vpop.f32.mrf.mxu0
  %555 = vmatprep.mubr.f32.mxu0 0.0
  %v556 = vand.u32 %v66, 4294901760
  %557 = vmatmul.mubr.f32.gmra.mxu0 %v556
  %v558 = vpop.f32.mrf.mxu0
  %v559 = vadd.f32 %v270, %v558
  %v560 = vpop.f32.mrf.mxu0
  %561 = vmatprep.mubr.f32.mxu0 0.0
  %v562 = vand.u32 %v69, 4294901760
  %563 = vmatmul.mubr.f32.gmra.mxu0 %v562
  %v564 = vpop.f32.mrf.mxu0
  %v565 = vadd.f32 %v280, %v564
  %v566 = vpop.f32.mrf.mxu0
  %567 = vmatprep.mubr.f32.mxu0 0.0
  %v568 = vand.u32 %v72, 4294901760
  %569 = vmatmul.mubr.f32.gmra.mxu0 %v568
  %v570 = vpop.f32.mrf.mxu0
  %v571 = vadd.f32 %v290, %v570
  %v572 = vpop.f32.mrf.mxu0
  %573 = vmatprep.mubr.f32.mxu0 0.0
  %v574 = vand.u32 %v75, 4294901760
  %575 = vmatmul.mubr.f32.gmra.mxu0 %v574
  %v576 = vpop.f32.mrf.mxu0
  %v577 = vadd.f32 %v300, %v576
  %v578 = vpop.f32.mrf.mxu0
  %579 = vmatprep.mubr.f32.mxu0 0.0
  %v580 = vand.u32 %v78, 4294901760
  %581 = vmatmul.mubr.f32.gmra.mxu0 %v580
  %v582 = vpop.f32.mrf.mxu0
  %v583 = vadd.f32 %v310, %v582
  %v584 = vpop.f32.mrf.mxu0
  %585 = vmatprep.mubr.f32.mxu0 0.0
  %v586 = vand.u32 %v81, 4294901760
  %587 = vmatmul.mubr.f32.gmra.mxu0 %v586
  %v588 = vpop.f32.mrf.mxu0
  %v589 = vadd.f32 %v320, %v588
  %v590 = vpop.f32.mrf.mxu0
  %591 = vmatprep.mubr.f32.mxu0 0.0
  %v592 = vand.u32 %v84, 4294901760
  %593 = vmatmul.mubr.f32.gmra.mxu0 %v592
  %v594 = vpop.f32.mrf.mxu0
  %v595 = vadd.f32 %v330, %v594
  %v596 = vpop.f32.mrf.mxu0
  %597 = vmatprep.mubr.f32.mxu0 0.0
  %v598 = vand.u32 %v87, 4294901760
  %599 = vmatmul.mubr.f32.gmra.mxu0 %v598
  %v600 = vpop.f32.mrf.mxu0
  %v601 = vadd.f32 %v340, %v600
  %v602 = vpop.f32.mrf.mxu0
  %603 = vmatprep.mubr.f32.mxu0 0.0
  %v604 = vand.u32 %v90, 4294901760
  %605 = vmatmul.mubr.f32.gmra.mxu0 %v604
  %v606 = vpop.f32.mrf.mxu0
  %v607 = vadd.f32 %v350, %v606
  %v608 = vpop.f32.mrf.mxu0
  %609 = vmatprep.mubr.f32.mxu0 0.0
  %v610 = vand.u32 %v93, 4294901760
  %611 = vmatmul.mubr.f32.gmra.mxu0 %v610
  %v612 = vpop.f32.mrf.mxu0
  %v613 = vadd.f32 %v360, %v612
  %v614 = vpop.f32.mrf.mxu0
  %615 = vmatprep.mubr.f32.mxu0 0.0
  %v616 = vand.u32 %v96, 4294901760
  %617 = vmatmul.mubr.f32.gmra.mxu0 %v616
  %v618 = vpop.f32.mrf.mxu0
  %v619 = vadd.f32 %v370, %v618
  %v620 = vpop.f32.mrf.mxu0
  %621 = vmatprep.mubr.f32.mxu0 0.0
  %v622 = vand.u32 %v99, 4294901760
  %623 = vmatmul.mubr.f32.gmra.mxu0 %v622
  %v624 = vpop.f32.mrf.mxu0
  %v625 = vadd.f32 %v380, %v624
  %v626 = vpop.f32.mrf.mxu0
  %627 = vmatprep.mubr.f32.mxu0 0.0
  %v628 = vand.u32 %v102, 4294901760
  %629 = vmatmul.mubr.f32.gmra.mxu0 %v628
  %v630 = vpop.f32.mrf.mxu0
  %v631 = vadd.f32 %v390, %v630
  %v632 = vpop.f32.mrf.mxu0
  %633 = vdwg.mxu0
  %634 = vmatprep.subr.mxu0 0.0
  %v635 = vand.u32 %v150, 4294901760
  %v636 = vsub.f32 %v150, %v635
  %637 = vmatpush1.xpose.msra.mxu0 %v636
  %638 = vmatprep.subr.mxu0 0.0
  %v639 = vand.u32 %v147, 4294901760
  %v640 = vsub.f32 %v147, %v639
  %641 = vmatpush1.xpose.msra.mxu0 %v640
  %642 = vmatprep.subr.mxu0 0.0
  %v643 = vand.u32 %v144, 4294901760
  %v644 = vsub.f32 %v144, %v643
  %645 = vmatpush1.xpose.msra.mxu0 %v644
  %646 = vmatprep.subr.mxu0 0.0
  %v647 = vand.u32 %v141, 4294901760
  %v648 = vsub.f32 %v141, %v647
  %649 = vmatpush1.xpose.msra.mxu0 %v648
  %650 = vmatprep.subr.mxu0 0.0
  %v651 = vand.u32 %v138, 4294901760
  %v652 = vsub.f32 %v138, %v651
  %653 = vmatpush1.xpose.msra.mxu0 %v652
  %654 = vmatprep.subr.mxu0 0.0
  %v655 = vand.u32 %v135, 4294901760
  %v656 = vsub.f32 %v135, %v655
  %657 = vmatpush1.xpose.msra.mxu0 %v656
  %658 = vmatprep.subr.mxu0 0.0
  %v659 = vand.u32 %v132, 4294901760
  %v660 = vsub.f32 %v132, %v659
  %661 = vmatpush1.xpose.msra.mxu0 %v660
  %662 = vmatprep.subr.mxu0 0.0
  %v663 = vand.u32 %v129, 4294901760
  %v664 = vsub.f32 %v129, %v663
  %665 = vmatpush1.xpose.msra.mxu0 %v664
  %666 = vmatprep.subr.mxu0 0.0
  %v667 = vand.u32 %v126, 4294901760
  %v668 = vsub.f32 %v126, %v667
  %669 = vmatpush1.xpose.msra.mxu0 %v668
  %670 = vmatprep.subr.mxu0 0.0
  %v671 = vand.u32 %v123, 4294901760
  %v672 = vsub.f32 %v123, %v671
  %673 = vmatpush1.xpose.msra.mxu0 %v672
  %674 = vmatprep.subr.mxu0 0.0
  %v675 = vand.u32 %v120, 4294901760
  %v676 = vsub.f32 %v120, %v675
  %677 = vmatpush1.xpose.msra.mxu0 %v676
  %678 = vmatprep.subr.mxu0 0.0
  %v679 = vand.u32 %v117, 4294901760
  %v680 = vsub.f32 %v117, %v679
  %681 = vmatpush1.xpose.msra.mxu0 %v680
  %682 = vmatprep.subr.mxu0 0.0
  %v683 = vand.u32 %v114, 4294901760
  %v684 = vsub.f32 %v114, %v683
  %685 = vmatpush1.xpose.msra.mxu0 %v684
  %686 = vmatprep.subr.mxu0 0.0
  %v687 = vand.u32 %v111, 4294901760
  %v688 = vsub.f32 %v111, %v687
  %689 = vmatpush1.xpose.msra.mxu0 %v688
  %690 = vmatprep.subr.mxu0 0.0
  %v691 = vand.u32 %v108, 4294901760
  %v692 = vsub.f32 %v108, %v691
  %693 = vmatpush1.xpose.msra.mxu0 %v692
  %694 = vmatprep.subr.mxu0 0.0
  %v695 = vand.u32 %v105, 4294901760
  %v696 = vsub.f32 %v105, %v695
  %697 = vmatpush1.xpose.msra.mxu0 %v696
  %698 = vmatprep.subr.mxu0 0.0
  %699 = vmatpush2.xpose.msra.mxu0 0.0
  %700 = vmatprep.subr.mxu0 0.0
  %701 = vmatpush2.xpose.msra.mxu0 0.0
  %702 = vmatprep.subr.mxu0 0.0
  %703 = vmatpush2.xpose.msra.mxu0 0.0
  %704 = vmatprep.subr.mxu0 0.0
  %705 = vmatpush2.xpose.msra.mxu0 0.0
  %706 = vmatprep.subr.mxu0 0.0
  %707 = vmatpush2.xpose.msra.mxu0 0.0
  %708 = vmatprep.subr.mxu0 0.0
  %709 = vmatpush2.xpose.msra.mxu0 0.0
  %710 = vmatprep.subr.mxu0 0.0
  %711 = vmatpush2.xpose.msra.mxu0 0.0
  %712 = vmatprep.subr.mxu0 0.0
  %713 = vmatpush2.xpose.msra.mxu0 0.0
  %714 = vmatprep.subr.mxu0 0.0
  %715 = vmatpush2.xpose.msra.mxu0 0.0
  %716 = vmatprep.subr.mxu0 0.0
  %717 = vmatpush2.xpose.msra.mxu0 0.0
  %718 = vmatprep.subr.mxu0 0.0
  %719 = vmatpush2.xpose.msra.mxu0 0.0
  %720 = vmatprep.subr.mxu0 0.0
  %721 = vmatpush2.xpose.msra.mxu0 0.0
  %722 = vmatprep.subr.mxu0 0.0
  %723 = vmatpush2.xpose.msra.mxu0 0.0
  %724 = vmatprep.subr.mxu0 0.0
  %725 = vmatpush2.xpose.msra.mxu0 0.0
  %726 = vmatprep.subr.mxu0 0.0
  %727 = vmatpush2.xpose.msra.mxu0 0.0
  %728 = vmatprep.subr.mxu0 0.0
  %729 = vmatpush2.xpose.msra.mxu0 0.0
  %730 = vmatprep.mubr.f32.mxu0 0.0
  %v731 = vand.u32 %v57, 4294901760
  %v732 = vsub.f32 %v57, %v731
  %733 = vmatmul.mubr.f32.gmra.mxu0 %v732
  %v734 = vpop.f32.mrf.mxu0
  %v735 = vadd.f32 %v541, %v734
  %v736 = vpop.f32.mrf.mxu0
  %737 = vmatprep.mubr.f32.mxu0 0.0
  %v738 = vand.u32 %v60, 4294901760
  %v739 = vsub.f32 %v60, %v738
  %740 = vmatmul.mubr.f32.gmra.mxu0 %v739
  %v741 = vpop.f32.mrf.mxu0
  %v742 = vadd.f32 %v547, %v741
  %v743 = vpop.f32.mrf.mxu0
  %744 = vmatprep.mubr.f32.mxu0 0.0
  %v745 = vand.u32 %v63, 4294901760
  %v746 = vsub.f32 %v63, %v745
  %747 = vmatmul.mubr.f32.gmra.mxu0 %v746
  %v748 = vpop.f32.mrf.mxu0
  %v749 = vadd.f32 %v553, %v748
  %v750 = vpop.f32.mrf.mxu0
  %751 = vmatprep.mubr.f32.mxu0 0.0
  %v752 = vand.u32 %v66, 4294901760
  %v753 = vsub.f32 %v66, %v752
  %754 = vmatmul.mubr.f32.gmra.mxu0 %v753
  %v755 = vpop.f32.mrf.mxu0
  %v756 = vadd.f32 %v559, %v755
  %v757 = vpop.f32.mrf.mxu0
  %758 = vmatprep.mubr.f32.mxu0 0.0
  %v759 = vand.u32 %v69, 4294901760
  %v760 = vsub.f32 %v69, %v759
  %761 = vmatmul.mubr.f32.gmra.mxu0 %v760
  %v762 = vpop.f32.mrf.mxu0
  %v763 = vadd.f32 %v565, %v762
  %v764 = vpop.f32.mrf.mxu0
  %765 = vmatprep.mubr.f32.mxu0 0.0
  %v766 = vand.u32 %v72, 4294901760
  %v767 = vsub.f32 %v72, %v766
  %768 = vmatmul.mubr.f32.gmra.mxu0 %v767
  %v769 = vpop.f32.mrf.mxu0
  %v770 = vadd.f32 %v571, %v769
  %v771 = vpop.f32.mrf.mxu0
  %772 = vmatprep.mubr.f32.mxu0 0.0
  %v773 = vand.u32 %v75, 4294901760
  %v774 = vsub.f32 %v75, %v773
  %775 = vmatmul.mubr.f32.gmra.mxu0 %v774
  %v776 = vpop.f32.mrf.mxu0
  %v777 = vadd.f32 %v577, %v776
  %v778 = vpop.f32.mrf.mxu0
  %779 = vmatprep.mubr.f32.mxu0 0.0
  %v780 = vand.u32 %v78, 4294901760
  %v781 = vsub.f32 %v78, %v780
  %782 = vmatmul.mubr.f32.gmra.mxu0 %v781
  %v783 = vpop.f32.mrf.mxu0
  %v784 = vadd.f32 %v583, %v783
  %v785 = vpop.f32.mrf.mxu0
  %786 = vmatprep.mubr.f32.mxu0 0.0
  %v787 = vand.u32 %v81, 4294901760
  %v788 = vsub.f32 %v81, %v787
  %789 = vmatmul.mubr.f32.gmra.mxu0 %v788
  %v790 = vpop.f32.mrf.mxu0
  %v791 = vadd.f32 %v589, %v790
  %v792 = vpop.f32.mrf.mxu0
  %793 = vmatprep.mubr.f32.mxu0 0.0
  %v794 = vand.u32 %v84, 4294901760
  %v795 = vsub.f32 %v84, %v794
  %796 = vmatmul.mubr.f32.gmra.mxu0 %v795
  %v797 = vpop.f32.mrf.mxu0
  %v798 = vadd.f32 %v595, %v797
  %v799 = vpop.f32.mrf.mxu0
  %800 = vmatprep.mubr.f32.mxu0 0.0
  %v801 = vand.u32 %v87, 4294901760
  %v802 = vsub.f32 %v87, %v801
  %803 = vmatmul.mubr.f32.gmra.mxu0 %v802
  %v804 = vpop.f32.mrf.mxu0
  %v805 = vadd.f32 %v601, %v804
  %v806 = vpop.f32.mrf.mxu0
  %807 = vmatprep.mubr.f32.mxu0 0.0
  %v808 = vand.u32 %v90, 4294901760
  %v809 = vsub.f32 %v90, %v808
  %810 = vmatmul.mubr.f32.gmra.mxu0 %v809
  %v811 = vpop.f32.mrf.mxu0
  %v812 = vadd.f32 %v607, %v811
  %v813 = vpop.f32.mrf.mxu0
  %814 = vmatprep.mubr.f32.mxu0 0.0
  %v815 = vand.u32 %v93, 4294901760
  %v816 = vsub.f32 %v93, %v815
  %817 = vmatmul.mubr.f32.gmra.mxu0 %v816
  %v818 = vpop.f32.mrf.mxu0
  %v819 = vadd.f32 %v613, %v818
  %v820 = vpop.f32.mrf.mxu0
  %821 = vmatprep.mubr.f32.mxu0 0.0
  %v822 = vand.u32 %v96, 4294901760
  %v823 = vsub.f32 %v96, %v822
  %824 = vmatmul.mubr.f32.gmra.mxu0 %v823
  %v825 = vpop.f32.mrf.mxu0
  %v826 = vadd.f32 %v619, %v825
  %v827 = vpop.f32.mrf.mxu0
  %828 = vmatprep.mubr.f32.mxu0 0.0
  %v829 = vand.u32 %v99, 4294901760
  %v830 = vsub.f32 %v99, %v829
  %831 = vmatmul.mubr.f32.gmra.mxu0 %v830
  %v832 = vpop.f32.mrf.mxu0
  %v833 = vadd.f32 %v625, %v832
  %v834 = vpop.f32.mrf.mxu0
  %835 = vmatprep.mubr.f32.mxu0 0.0
  %v836 = vand.u32 %v102, 4294901760
  %v837 = vsub.f32 %v102, %v836
  %838 = vmatmul.mubr.f32.gmra.mxu0 %v837
  %v839 = vpop.f32.mrf.mxu0
  %v840 = vadd.f32 %v631, %v839
  %v841 = vpop.f32.mrf.mxu0
  %842 = vdwg.mxu0
  %843 = vmatprep.subr.mxu0 0.0
  %v844 = vand.u32 %v150, 4294901760
  %845 = vmatpush1.xpose.msra.mxu0 %v844
  %846 = vmatprep.subr.mxu0 0.0
  %v847 = vand.u32 %v147, 4294901760
  %848 = vmatpush1.xpose.msra.mxu0 %v847
  %849 = vmatprep.subr.mxu0 0.0
  %v850 = vand.u32 %v144, 4294901760
  %851 = vmatpush1.xpose.msra.mxu0 %v850
  %852 = vmatprep.subr.mxu0 0.0
  %v853 = vand.u32 %v141, 4294901760
  %854 = vmatpush1.xpose.msra.mxu0 %v853
  %855 = vmatprep.subr.mxu0 0.0
  %v856 = vand.u32 %v138, 4294901760
  %857 = vmatpush1.xpose.msra.mxu0 %v856
  %858 = vmatprep.subr.mxu0 0.0
  %v859 = vand.u32 %v135, 4294901760
  %860 = vmatpush1.xpose.msra.mxu0 %v859
  %861 = vmatprep.subr.mxu0 0.0
  %v862 = vand.u32 %v132, 4294901760
  %863 = vmatpush1.xpose.msra.mxu0 %v862
  %864 = vmatprep.subr.mxu0 0.0
  %v865 = vand.u32 %v129, 4294901760
  %866 = vmatpush1.xpose.msra.mxu0 %v865
  %867 = vmatprep.subr.mxu0 0.0
  %v868 = vand.u32 %v126, 4294901760
  %869 = vmatpush1.xpose.msra.mxu0 %v868
  %870 = vmatprep.subr.mxu0 0.0
  %v871 = vand.u32 %v123, 4294901760
  %872 = vmatpush1.xpose.msra.mxu0 %v871
  %873 = vmatprep.subr.mxu0 0.0
  %v874 = vand.u32 %v120, 4294901760
  %875 = vmatpush1.xpose.msra.mxu0 %v874
  %876 = vmatprep.subr.mxu0 0.0
  %v877 = vand.u32 %v117, 4294901760
  %878 = vmatpush1.xpose.msra.mxu0 %v877
  %879 = vmatprep.subr.mxu0 0.0
  %v880 = vand.u32 %v114, 4294901760
  %881 = vmatpush1.xpose.msra.mxu0 %v880
  %882 = vmatprep.subr.mxu0 0.0
  %v883 = vand.u32 %v111, 4294901760
  %884 = vmatpush1.xpose.msra.mxu0 %v883
  %885 = vmatprep.subr.mxu0 0.0
  %v886 = vand.u32 %v108, 4294901760
  %887 = vmatpush1.xpose.msra.mxu0 %v886
  %888 = vmatprep.subr.mxu0 0.0
  %v889 = vand.u32 %v105, 4294901760
  %890 = vmatpush1.xpose.msra.mxu0 %v889
  %891 = vmatprep.subr.mxu0 0.0
  %892 = vmatpush2.xpose.msra.mxu0 0.0
  %893 = vmatprep.subr.mxu0 0.0
  %894 = vmatpush2.xpose.msra.mxu0 0.0
  %895 = vmatprep.subr.mxu0 0.0
  %896 = vmatpush2.xpose.msra.mxu0 0.0
  %897 = vmatprep.subr.mxu0 0.0
  %898 = vmatpush2.xpose.msra.mxu0 0.0
  %899 = vmatprep.subr.mxu0 0.0
  %900 = vmatpush2.xpose.msra.mxu0 0.0
  %901 = vmatprep.subr.mxu0 0.0
  %902 = vmatpush2.xpose.msra.mxu0 0.0
  %903 = vmatprep.subr.mxu0 0.0
  %904 = vmatpush2.xpose.msra.mxu0 0.0
  %905 = vmatprep.subr.mxu0 0.0
  %906 = vmatpush2.xpose.msra.mxu0 0.0
  %907 = vmatprep.subr.mxu0 0.0
  %908 = vmatpush2.xpose.msra.mxu0 0.0
  %909 = vmatprep.subr.mxu0 0.0
  %910 = vmatpush2.xpose.msra.mxu0 0.0
  %911 = vmatprep.subr.mxu0 0.0
  %912 = vmatpush2.xpose.msra.mxu0 0.0
  %913 = vmatprep.subr.mxu0 0.0
  %914 = vmatpush2.xpose.msra.mxu0 0.0
  %915 = vmatprep.subr.mxu0 0.0
  %916 = vmatpush2.xpose.msra.mxu0 0.0
  %917 = vmatprep.subr.mxu0 0.0
  %918 = vmatpush2.xpose.msra.mxu0 0.0
  %919 = vmatprep.subr.mxu0 0.0
  %920 = vmatpush2.xpose.msra.mxu0 0.0
  %921 = vmatprep.subr.mxu0 0.0
  %922 = vmatpush2.xpose.msra.mxu0 0.0
  %923 = vmatprep.mubr.f32.mxu0 0.0
  %v924 = vand.u32 %v57, 4294901760
  %v925 = vsub.f32 %v57, %v924
  %v926 = vand.u32 %v925, 4294901760
  %927 = vmatmul.mubr.f32.gmra.mxu0 %v926
  %v928 = vpop.f32.mrf.mxu0
  %v929 = vadd.f32 %v735, %v928
  %v930 = vpop.f32.mrf.mxu0
  %931 = vmatprep.mubr.f32.mxu0 0.0
  %v932 = vand.u32 %v60, 4294901760
  %v933 = vsub.f32 %v60, %v932
  %v934 = vand.u32 %v933, 4294901760
  %935 = vmatmul.mubr.f32.gmra.mxu0 %v934
  %v936 = vpop.f32.mrf.mxu0
  %v937 = vadd.f32 %v742, %v936
  %v938 = vpop.f32.mrf.mxu0
  %939 = vmatprep.mubr.f32.mxu0 0.0
  %v940 = vand.u32 %v63, 4294901760
  %v941 = vsub.f32 %v63, %v940
  %v942 = vand.u32 %v941, 4294901760
  %943 = vmatmul.mubr.f32.gmra.mxu0 %v942
  %v944 = vpop.f32.mrf.mxu0
  %v945 = vadd.f32 %v749, %v944
  %v946 = vpop.f32.mrf.mxu0
  %947 = vmatprep.mubr.f32.mxu0 0.0
  %v948 = vand.u32 %v66, 4294901760
  %v949 = vsub.f32 %v66, %v948
  %v950 = vand.u32 %v949, 4294901760
  %951 = vmatmul.mubr.f32.gmra.mxu0 %v950
  %v952 = vpop.f32.mrf.mxu0
  %v953 = vadd.f32 %v756, %v952
  %v954 = vpop.f32.mrf.mxu0
  %955 = vmatprep.mubr.f32.mxu0 0.0
  %v956 = vand.u32 %v69, 4294901760
  %v957 = vsub.f32 %v69, %v956
  %v958 = vand.u32 %v957, 4294901760
  %959 = vmatmul.mubr.f32.gmra.mxu0 %v958
  %v960 = vpop.f32.mrf.mxu0
  %v961 = vadd.f32 %v763, %v960
  %v962 = vpop.f32.mrf.mxu0
  %963 = vmatprep.mubr.f32.mxu0 0.0
  %v964 = vand.u32 %v72, 4294901760
  %v965 = vsub.f32 %v72, %v964
  %v966 = vand.u32 %v965, 4294901760
  %967 = vmatmul.mubr.f32.gmra.mxu0 %v966
  %v968 = vpop.f32.mrf.mxu0
  %v969 = vadd.f32 %v770, %v968
  %v970 = vpop.f32.mrf.mxu0
  %971 = vmatprep.mubr.f32.mxu0 0.0
  %v972 = vand.u32 %v75, 4294901760
  %v973 = vsub.f32 %v75, %v972
  %v974 = vand.u32 %v973, 4294901760
  %975 = vmatmul.mubr.f32.gmra.mxu0 %v974
  %v976 = vpop.f32.mrf.mxu0
  %v977 = vadd.f32 %v777, %v976
  %v978 = vpop.f32.mrf.mxu0
  %979 = vmatprep.mubr.f32.mxu0 0.0
  %v980 = vand.u32 %v78, 4294901760
  %v981 = vsub.f32 %v78, %v980
  %v982 = vand.u32 %v981, 4294901760
  %983 = vmatmul.mubr.f32.gmra.mxu0 %v982
  %v984 = vpop.f32.mrf.mxu0
  %v985 = vadd.f32 %v784, %v984
  %v986 = vpop.f32.mrf.mxu0
  %987 = vmatprep.mubr.f32.mxu0 0.0
  %v988 = vand.u32 %v81, 4294901760
  %v989 = vsub.f32 %v81, %v988
  %v990 = vand.u32 %v989, 4294901760
  %991 = vmatmul.mubr.f32.gmra.mxu0 %v990
  %v992 = vpop.f32.mrf.mxu0
  %v993 = vadd.f32 %v791, %v992
  %v994 = vpop.f32.mrf.mxu0
  %995 = vmatprep.mubr.f32.mxu0 0.0
  %v996 = vand.u32 %v84, 4294901760
  %v997 = vsub.f32 %v84, %v996
  %v998 = vand.u32 %v997, 4294901760
  %999 = vmatmul.mubr.f32.gmra.mxu0 %v998
  %v1000 = vpop.f32.mrf.mxu0
  %v1001 = vadd.f32 %v798, %v1000
  %v1002 = vpop.f32.mrf.mxu0
  %1003 = vmatprep.mubr.f32.mxu0 0.0
  %v1004 = vand.u32 %v87, 4294901760
  %v1005 = vsub.f32 %v87, %v1004
  %v1006 = vand.u32 %v1005, 4294901760
  %1007 = vmatmul.mubr.f32.gmra.mxu0 %v1006
  %v1008 = vpop.f32.mrf.mxu0
  %v1009 = vadd.f32 %v805, %v1008
  %v1010 = vpop.f32.mrf.mxu0
  %1011 = vmatprep.mubr.f32.mxu0 0.0
  %v1012 = vand.u32 %v90, 4294901760
  %v1013 = vsub.f32 %v90, %v1012
  %v1014 = vand.u32 %v1013, 4294901760
  %1015 = vmatmul.mubr.f32.gmra.mxu0 %v1014
  %v1016 = vpop.f32.mrf.mxu0
  %v1017 = vadd.f32 %v812, %v1016
  %v1018 = vpop.f32.mrf.mxu0
  %1019 = vmatprep.mubr.f32.mxu0 0.0
  %v1020 = vand.u32 %v93, 4294901760
  %v1021 = vsub.f32 %v93, %v1020
  %v1022 = vand.u32 %v1021, 4294901760
  %1023 = vmatmul.mubr.f32.gmra.mxu0 %v1022
  %v1024 = vpop.f32.mrf.mxu0
  %v1025 = vadd.f32 %v819, %v1024
  %v1026 = vpop.f32.mrf.mxu0
  %1027 = vmatprep.mubr.f32.mxu0 0.0
  %v1028 = vand.u32 %v96, 4294901760
  %v1029 = vsub.f32 %v96, %v1028
  %v1030 = vand.u32 %v1029, 4294901760
  %1031 = vmatmul.mubr.f32.gmra.mxu0 %v1030
  %v1032 = vpop.f32.mrf.mxu0
  %v1033 = vadd.f32 %v826, %v1032
  %v1034 = vpop.f32.mrf.mxu0
  %1035 = vmatprep.mubr.f32.mxu0 0.0
  %v1036 = vand.u32 %v99, 4294901760
  %v1037 = vsub.f32 %v99, %v1036
  %v1038 = vand.u32 %v1037, 4294901760
  %1039 = vmatmul.mubr.f32.gmra.mxu0 %v1038
  %v1040 = vpop.f32.mrf.mxu0
  %v1041 = vadd.f32 %v833, %v1040
  %v1042 = vpop.f32.mrf.mxu0
  %1043 = vmatprep.mubr.f32.mxu0 0.0
  %v1044 = vand.u32 %v102, 4294901760
  %v1045 = vsub.f32 %v102, %v1044
  %v1046 = vand.u32 %v1045, 4294901760
  %1047 = vmatmul.mubr.f32.gmra.mxu0 %v1046
  %v1048 = vpop.f32.mrf.mxu0
  %v1049 = vadd.f32 %v840, %v1048
  %v1050 = vpop.f32.mrf.mxu0
  %1051 = vdwg.mxu0
  %1052 = vmatprep.subr.mxu0 0.0
  %v1053 = vand.u32 %v150, 4294901760
  %v1054 = vsub.f32 %v150, %v1053
  %v1055 = vand.u32 %v1054, 4294901760
  %1056 = vmatpush1.xpose.msra.mxu0 %v1055
  %1057 = vmatprep.subr.mxu0 0.0
  %v1058 = vand.u32 %v147, 4294901760
  %v1059 = vsub.f32 %v147, %v1058
  %v1060 = vand.u32 %v1059, 4294901760
  %1061 = vmatpush1.xpose.msra.mxu0 %v1060
  %1062 = vmatprep.subr.mxu0 0.0
  %v1063 = vand.u32 %v144, 4294901760
  %v1064 = vsub.f32 %v144, %v1063
  %v1065 = vand.u32 %v1064, 4294901760
  %1066 = vmatpush1.xpose.msra.mxu0 %v1065
  %1067 = vmatprep.subr.mxu0 0.0
  %v1068 = vand.u32 %v141, 4294901760
  %v1069 = vsub.f32 %v141, %v1068
  %v1070 = vand.u32 %v1069, 4294901760
  %1071 = vmatpush1.xpose.msra.mxu0 %v1070
  %1072 = vmatprep.subr.mxu0 0.0
  %v1073 = vand.u32 %v138, 4294901760
  %v1074 = vsub.f32 %v138, %v1073
  %v1075 = vand.u32 %v1074, 4294901760
  %1076 = vmatpush1.xpose.msra.mxu0 %v1075
  %1077 = vmatprep.subr.mxu0 0.0
  %v1078 = vand.u32 %v135, 4294901760
  %v1079 = vsub.f32 %v135, %v1078
  %v1080 = vand.u32 %v1079, 4294901760
  %1081 = vmatpush1.xpose.msra.mxu0 %v1080
  %1082 = vmatprep.subr.mxu0 0.0
  %v1083 = vand.u32 %v132, 4294901760
  %v1084 = vsub.f32 %v132, %v1083
  %v1085 = vand.u32 %v1084, 4294901760
  %1086 = vmatpush1.xpose.msra.mxu0 %v1085
  %1087 = vmatprep.subr.mxu0 0.0
  %v1088 = vand.u32 %v129, 4294901760
  %v1089 = vsub.f32 %v129, %v1088
  %v1090 = vand.u32 %v1089, 4294901760
  %1091 = vmatpush1.xpose.msra.mxu0 %v1090
  %1092 = vmatprep.subr.mxu0 0.0
  %v1093 = vand.u32 %v126, 4294901760
  %v1094 = vsub.f32 %v126, %v1093
  %v1095 = vand.u32 %v1094, 4294901760
  %1096 = vmatpush1.xpose.msra.mxu0 %v1095
  %1097 = vmatprep.subr.mxu0 0.0
  %v1098 = vand.u32 %v123, 4294901760
  %v1099 = vsub.f32 %v123, %v1098
  %v1100 = vand.u32 %v1099, 4294901760
  %1101 = vmatpush1.xpose.msra.mxu0 %v1100
  %1102 = vmatprep.subr.mxu0 0.0
  %v1103 = vand.u32 %v120, 4294901760
  %v1104 = vsub.f32 %v120, %v1103
  %v1105 = vand.u32 %v1104, 4294901760
  %1106 = vmatpush1.xpose.msra.mxu0 %v1105
  %1107 = vmatprep.subr.mxu0 0.0
  %v1108 = vand.u32 %v117, 4294901760
  %v1109 = vsub.f32 %v117, %v1108
  %v1110 = vand.u32 %v1109, 4294901760
  %1111 = vmatpush1.xpose.msra.mxu0 %v1110
  %1112 = vmatprep.subr.mxu0 0.0
  %v1113 = vand.u32 %v114, 4294901760
  %v1114 = vsub.f32 %v114, %v1113
  %v1115 = vand.u32 %v1114, 4294901760
  %1116 = vmatpush1.xpose.msra.mxu0 %v1115
  %1117 = vmatprep.subr.mxu0 0.0
  %v1118 = vand.u32 %v111, 4294901760
  %v1119 = vsub.f32 %v111, %v1118
  %v1120 = vand.u32 %v1119, 4294901760
  %1121 = vmatpush1.xpose.msra.mxu0 %v1120
  %1122 = vmatprep.subr.mxu0 0.0
  %v1123 = vand.u32 %v108, 4294901760
  %v1124 = vsub.f32 %v108, %v1123
  %v1125 = vand.u32 %v1124, 4294901760
  %1126 = vmatpush1.xpose.msra.mxu0 %v1125
  %1127 = vmatprep.subr.mxu0 0.0
  %v1128 = vand.u32 %v105, 4294901760
  %v1129 = vsub.f32 %v105, %v1128
  %v1130 = vand.u32 %v1129, 4294901760
  %1131 = vmatpush1.xpose.msra.mxu0 %v1130
  %1132 = vmatprep.subr.mxu0 0.0
  %1133 = vmatpush2.xpose.msra.mxu0 0.0
  %1134 = vmatprep.subr.mxu0 0.0
  %1135 = vmatpush2.xpose.msra.mxu0 0.0
  %1136 = vmatprep.subr.mxu0 0.0
  %1137 = vmatpush2.xpose.msra.mxu0 0.0
  %1138 = vmatprep.subr.mxu0 0.0
  %1139 = vmatpush2.xpose.msra.mxu0 0.0
  %1140 = vmatprep.subr.mxu0 0.0
  %1141 = vmatpush2.xpose.msra.mxu0 0.0
  %1142 = vmatprep.subr.mxu0 0.0
  %1143 = vmatpush2.xpose.msra.mxu0 0.0
  %1144 = vmatprep.subr.mxu0 0.0
  %1145 = vmatpush2.xpose.msra.mxu0 0.0
  %1146 = vmatprep.subr.mxu0 0.0
  %1147 = vmatpush2.xpose.msra.mxu0 0.0
  %1148 = vmatprep.subr.mxu0 0.0
  %1149 = vmatpush2.xpose.msra.mxu0 0.0
  %1150 = vmatprep.subr.mxu0 0.0
  %1151 = vmatpush2.xpose.msra.mxu0 0.0
  %1152 = vmatprep.subr.mxu0 0.0
  %1153 = vmatpush2.xpose.msra.mxu0 0.0
  %1154 = vmatprep.subr.mxu0 0.0
  %1155 = vmatpush2.xpose.msra.mxu0 0.0
  %1156 = vmatprep.subr.mxu0 0.0
  %1157 = vmatpush2.xpose.msra.mxu0 0.0
  %1158 = vmatprep.subr.mxu0 0.0
  %1159 = vmatpush2.xpose.msra.mxu0 0.0
  %1160 = vmatprep.subr.mxu0 0.0
  %1161 = vmatpush2.xpose.msra.mxu0 0.0
  %1162 = vmatprep.subr.mxu0 0.0
  %1163 = vmatpush2.xpose.msra.mxu0 0.0
  %1164 = vmatprep.mubr.f32.mxu0 0.0
  %v1165 = vand.u32 %v57, 4294901760
  %1166 = vmatmul.mubr.f32.gmra.mxu0 %v1165
  %v1167 = vpop.f32.mrf.mxu0
  %v1168 = vadd.f32 %v929, %v1167
  %v1169 = vpop.f32.mrf.mxu0
  %1170 = vmatprep.mubr.f32.mxu0 0.0
  %v1171 = vand.u32 %v60, 4294901760
  %1172 = vmatmul.mubr.f32.gmra.mxu0 %v1171
  %v1173 = vpop.f32.mrf.mxu0
  %v1174 = vadd.f32 %v937, %v1173
  %v1175 = vpop.f32.mrf.mxu0
  %1176 = vmatprep.mubr.f32.mxu0 0.0
  %v1177 = vand.u32 %v63, 4294901760
  %1178 = vmatmul.mubr.f32.gmra.mxu0 %v1177
  %v1179 = vpop.f32.mrf.mxu0
  %v1180 = vadd.f32 %v945, %v1179
  %v1181 = vpop.f32.mrf.mxu0
  %1182 = vmatprep.mubr.f32.mxu0 0.0
  %v1183 = vand.u32 %v66, 4294901760
  %1184 = vmatmul.mubr.f32.gmra.mxu0 %v1183
  %v1185 = vpop.f32.mrf.mxu0
  %v1186 = vadd.f32 %v953, %v1185
  %v1187 = vpop.f32.mrf.mxu0
  %1188 = vmatprep.mubr.f32.mxu0 0.0
  %v1189 = vand.u32 %v69, 4294901760
  %1190 = vmatmul.mubr.f32.gmra.mxu0 %v1189
  %v1191 = vpop.f32.mrf.mxu0
  %v1192 = vadd.f32 %v961, %v1191
  %v1193 = vpop.f32.mrf.mxu0
  %1194 = vmatprep.mubr.f32.mxu0 0.0
  %v1195 = vand.u32 %v72, 4294901760
  %1196 = vmatmul.mubr.f32.gmra.mxu0 %v1195
  %v1197 = vpop.f32.mrf.mxu0
  %v1198 = vadd.f32 %v969, %v1197
  %v1199 = vpop.f32.mrf.mxu0
  %1200 = vmatprep.mubr.f32.mxu0 0.0
  %v1201 = vand.u32 %v75, 4294901760
  %1202 = vmatmul.mubr.f32.gmra.mxu0 %v1201
  %v1203 = vpop.f32.mrf.mxu0
  %v1204 = vadd.f32 %v977, %v1203
  %v1205 = vpop.f32.mrf.mxu0
  %1206 = vmatprep.mubr.f32.mxu0 0.0
  %v1207 = vand.u32 %v78, 4294901760
  %1208 = vmatmul.mubr.f32.gmra.mxu0 %v1207
  %v1209 = vpop.f32.mrf.mxu0
  %v1210 = vadd.f32 %v985, %v1209
  %v1211 = vpop.f32.mrf.mxu0
  %1212 = vmatprep.mubr.f32.mxu0 0.0
  %v1213 = vand.u32 %v81, 4294901760
  %1214 = vmatmul.mubr.f32.gmra.mxu0 %v1213
  %v1215 = vpop.f32.mrf.mxu0
  %v1216 = vadd.f32 %v993, %v1215
  %v1217 = vpop.f32.mrf.mxu0
  %1218 = vmatprep.mubr.f32.mxu0 0.0
  %v1219 = vand.u32 %v84, 4294901760
  %1220 = vmatmul.mubr.f32.gmra.mxu0 %v1219
  %v1221 = vpop.f32.mrf.mxu0
  %v1222 = vadd.f32 %v1001, %v1221
  %v1223 = vpop.f32.mrf.mxu0
  %1224 = vmatprep.mubr.f32.mxu0 0.0
  %v1225 = vand.u32 %v87, 4294901760
  %1226 = vmatmul.mubr.f32.gmra.mxu0 %v1225
  %v1227 = vpop.f32.mrf.mxu0
  %v1228 = vadd.f32 %v1009, %v1227
  %v1229 = vpop.f32.mrf.mxu0
  %1230 = vmatprep.mubr.f32.mxu0 0.0
  %v1231 = vand.u32 %v90, 4294901760
  %1232 = vmatmul.mubr.f32.gmra.mxu0 %v1231
  %v1233 = vpop.f32.mrf.mxu0
  %v1234 = vadd.f32 %v1017, %v1233
  %v1235 = vpop.f32.mrf.mxu0
  %1236 = vmatprep.mubr.f32.mxu0 0.0
  %v1237 = vand.u32 %v93, 4294901760
  %1238 = vmatmul.mubr.f32.gmra.mxu0 %v1237
  %v1239 = vpop.f32.mrf.mxu0
  %v1240 = vadd.f32 %v1025, %v1239
  %v1241 = vpop.f32.mrf.mxu0
  %1242 = vmatprep.mubr.f32.mxu0 0.0
  %v1243 = vand.u32 %v96, 4294901760
  %1244 = vmatmul.mubr.f32.gmra.mxu0 %v1243
  %v1245 = vpop.f32.mrf.mxu0
  %v1246 = vadd.f32 %v1033, %v1245
  %v1247 = vpop.f32.mrf.mxu0
  %1248 = vmatprep.mubr.f32.mxu0 0.0
  %v1249 = vand.u32 %v99, 4294901760
  %1250 = vmatmul.mubr.f32.gmra.mxu0 %v1249
  %v1251 = vpop.f32.mrf.mxu0
  %v1252 = vadd.f32 %v1041, %v1251
  %v1253 = vpop.f32.mrf.mxu0
  %1254 = vmatprep.mubr.f32.mxu0 0.0
  %v1255 = vand.u32 %v102, 4294901760
  %1256 = vmatmul.mubr.f32.gmra.mxu0 %v1255
  %v1257 = vpop.f32.mrf.mxu0
  %v1258 = vadd.f32 %v1049, %v1257
  %v1259 = vpop.f32.mrf.mxu0
  %1260 = vdwg.mxu0
  %1261 = vmatprep.subr.mxu0 0.0
  %v1262 = vand.u32 %v150, 4294901760
  %1263 = vmatpush1.xpose.msra.mxu0 %v1262
  %1264 = vmatprep.subr.mxu0 0.0
  %v1265 = vand.u32 %v147, 4294901760
  %1266 = vmatpush1.xpose.msra.mxu0 %v1265
  %1267 = vmatprep.subr.mxu0 0.0
  %v1268 = vand.u32 %v144, 4294901760
  %1269 = vmatpush1.xpose.msra.mxu0 %v1268
  %1270 = vmatprep.subr.mxu0 0.0
  %v1271 = vand.u32 %v141, 4294901760
  %1272 = vmatpush1.xpose.msra.mxu0 %v1271
  %1273 = vmatprep.subr.mxu0 0.0
  %v1274 = vand.u32 %v138, 4294901760
  %1275 = vmatpush1.xpose.msra.mxu0 %v1274
  %1276 = vmatprep.subr.mxu0 0.0
  %v1277 = vand.u32 %v135, 4294901760
  %1278 = vmatpush1.xpose.msra.mxu0 %v1277
  %1279 = vmatprep.subr.mxu0 0.0
  %v1280 = vand.u32 %v132, 4294901760
  %1281 = vmatpush1.xpose.msra.mxu0 %v1280
  %1282 = vmatprep.subr.mxu0 0.0
  %v1283 = vand.u32 %v129, 4294901760
  %1284 = vmatpush1.xpose.msra.mxu0 %v1283
  %1285 = vmatprep.subr.mxu0 0.0
  %v1286 = vand.u32 %v126, 4294901760
  %1287 = vmatpush1.xpose.msra.mxu0 %v1286
  %1288 = vmatprep.subr.mxu0 0.0
  %v1289 = vand.u32 %v123, 4294901760
  %1290 = vmatpush1.xpose.msra.mxu0 %v1289
  %1291 = vmatprep.subr.mxu0 0.0
  %v1292 = vand.u32 %v120, 4294901760
  %1293 = vmatpush1.xpose.msra.mxu0 %v1292
  %1294 = vmatprep.subr.mxu0 0.0
  %v1295 = vand.u32 %v117, 4294901760
  %1296 = vmatpush1.xpose.msra.mxu0 %v1295
  %1297 = vmatprep.subr.mxu0 0.0
  %v1298 = vand.u32 %v114, 4294901760
  %1299 = vmatpush1.xpose.msra.mxu0 %v1298
  %1300 = vmatprep.subr.mxu0 0.0
  %v1301 = vand.u32 %v111, 4294901760
  %1302 = vmatpush1.xpose.msra.mxu0 %v1301
  %1303 = vmatprep.subr.mxu0 0.0
  %v1304 = vand.u32 %v108, 4294901760
  %1305 = vmatpush1.xpose.msra.mxu0 %v1304
  %1306 = vmatprep.subr.mxu0 0.0
  %v1307 = vand.u32 %v105, 4294901760
  %1308 = vmatpush1.xpose.msra.mxu0 %v1307
  %1309 = vmatprep.subr.mxu0 0.0
  %1310 = vmatpush2.xpose.msra.mxu0 0.0
  %1311 = vmatprep.subr.mxu0 0.0
  %1312 = vmatpush2.xpose.msra.mxu0 0.0
  %1313 = vmatprep.subr.mxu0 0.0
  %1314 = vmatpush2.xpose.msra.mxu0 0.0
  %1315 = vmatprep.subr.mxu0 0.0
  %1316 = vmatpush2.xpose.msra.mxu0 0.0
  %1317 = vmatprep.subr.mxu0 0.0
  %1318 = vmatpush2.xpose.msra.mxu0 0.0
  %1319 = vmatprep.subr.mxu0 0.0
  %1320 = vmatpush2.xpose.msra.mxu0 0.0
  %1321 = vmatprep.subr.mxu0 0.0
  %1322 = vmatpush2.xpose.msra.mxu0 0.0
  %1323 = vmatprep.subr.mxu0 0.0
  %1324 = vmatpush2.xpose.msra.mxu0 0.0
  %1325 = vmatprep.subr.mxu0 0.0
  %1326 = vmatpush2.xpose.msra.mxu0 0.0
  %1327 = vmatprep.subr.mxu0 0.0
  %1328 = vmatpush2.xpose.msra.mxu0 0.0
  %1329 = vmatprep.subr.mxu0 0.0
  %1330 = vmatpush2.xpose.msra.mxu0 0.0
  %1331 = vmatprep.subr.mxu0 0.0
  %1332 = vmatpush2.xpose.msra.mxu0 0.0
  %1333 = vmatprep.subr.mxu0 0.0
  %1334 = vmatpush2.xpose.msra.mxu0 0.0
  %1335 = vmatprep.subr.mxu0 0.0
  %1336 = vmatpush2.xpose.msra.mxu0 0.0
  %1337 = vmatprep.subr.mxu0 0.0
  %1338 = vmatpush2.xpose.msra.mxu0 0.0
  %1339 = vmatprep.subr.mxu0 0.0
  %1340 = vmatpush2.xpose.msra.mxu0 0.0
  %1341 = vmatprep.mubr.f32.mxu0 0.0
  %v1342 = vand.u32 %v57, 4294901760
  %1343 = vmatmul.mubr.f32.gmra.mxu0 %v1342
  %v1344 = vpop.f32.mrf.mxu0
  %v1345 = vadd.f32 %v1168, %v1344
  %v1346 = vpop.f32.mrf.mxu0
  %1347 = vmatprep.mubr.f32.mxu0 0.0
  %v1348 = vand.u32 %v60, 4294901760
  %1349 = vmatmul.mubr.f32.gmra.mxu0 %v1348
  %v1350 = vpop.f32.mrf.mxu0
  %v1351 = vadd.f32 %v1174, %v1350
  %v1352 = vpop.f32.mrf.mxu0
  %1353 = vmatprep.mubr.f32.mxu0 0.0
  %v1354 = vand.u32 %v63, 4294901760
  %1355 = vmatmul.mubr.f32.gmra.mxu0 %v1354
  %v1356 = vpop.f32.mrf.mxu0
  %v1357 = vadd.f32 %v1180, %v1356
  %v1358 = vpop.f32.mrf.mxu0
  %1359 = vmatprep.mubr.f32.mxu0 0.0
  %v1360 = vand.u32 %v66, 4294901760
  %1361 = vmatmul.mubr.f32.gmra.mxu0 %v1360
  %v1362 = vpop.f32.mrf.mxu0
  %v1363 = vadd.f32 %v1186, %v1362
  %v1364 = vpop.f32.mrf.mxu0
  %1365 = vmatprep.mubr.f32.mxu0 0.0
  %v1366 = vand.u32 %v69, 4294901760
  %1367 = vmatmul.mubr.f32.gmra.mxu0 %v1366
  %v1368 = vpop.f32.mrf.mxu0
  %v1369 = vadd.f32 %v1192, %v1368
  %v1370 = vpop.f32.mrf.mxu0
  %1371 = vmatprep.mubr.f32.mxu0 0.0
  %v1372 = vand.u32 %v72, 4294901760
  %1373 = vmatmul.mubr.f32.gmra.mxu0 %v1372
  %v1374 = vpop.f32.mrf.mxu0
  %v1375 = vadd.f32 %v1198, %v1374
  %v1376 = vpop.f32.mrf.mxu0
  %1377 = vmatprep.mubr.f32.mxu0 0.0
  %v1378 = vand.u32 %v75, 4294901760
  %1379 = vmatmul.mubr.f32.gmra.mxu0 %v1378
  %v1380 = vpop.f32.mrf.mxu0
  %v1381 = vadd.f32 %v1204, %v1380
  %v1382 = vpop.f32.mrf.mxu0
  %1383 = vmatprep.mubr.f32.mxu0 0.0
  %v1384 = vand.u32 %v78, 4294901760
  %1385 = vmatmul.mubr.f32.gmra.mxu0 %v1384
  %v1386 = vpop.f32.mrf.mxu0
  %v1387 = vadd.f32 %v1210, %v1386
  %v1388 = vpop.f32.mrf.mxu0
  %1389 = vmatprep.mubr.f32.mxu0 0.0
  %v1390 = vand.u32 %v81, 4294901760
  %1391 = vmatmul.mubr.f32.gmra.mxu0 %v1390
  %v1392 = vpop.f32.mrf.mxu0
  %v1393 = vadd.f32 %v1216, %v1392
  %v1394 = vpop.f32.mrf.mxu0
  %1395 = vmatprep.mubr.f32.mxu0 0.0
  %v1396 = vand.u32 %v84, 4294901760
  %1397 = vmatmul.mubr.f32.gmra.mxu0 %v1396
  %v1398 = vpop.f32.mrf.mxu0
  %v1399 = vadd.f32 %v1222, %v1398
  %v1400 = vpop.f32.mrf.mxu0
  %1401 = vmatprep.mubr.f32.mxu0 0.0
  %v1402 = vand.u32 %v87, 4294901760
  %1403 = vmatmul.mubr.f32.gmra.mxu0 %v1402
  %v1404 = vpop.f32.mrf.mxu0
  %v1405 = vadd.f32 %v1228, %v1404
  %v1406 = vpop.f32.mrf.mxu0
  %1407 = vmatprep.mubr.f32.mxu0 0.0
  %v1408 = vand.u32 %v90, 4294901760
  %1409 = vmatmul.mubr.f32.gmra.mxu0 %v1408
  %v1410 = vpop.f32.mrf.mxu0
  %v1411 = vadd.f32 %v1234, %v1410
  %v1412 = vpop.f32.mrf.mxu0
  %1413 = vmatprep.mubr.f32.mxu0 0.0
  %v1414 = vand.u32 %v93, 4294901760
  %1415 = vmatmul.mubr.f32.gmra.mxu0 %v1414
  %v1416 = vpop.f32.mrf.mxu0
  %v1417 = vadd.f32 %v1240, %v1416
  %v1418 = vpop.f32.mrf.mxu0
  %1419 = vmatprep.mubr.f32.mxu0 0.0
  %v1420 = vand.u32 %v96, 4294901760
  %1421 = vmatmul.mubr.f32.gmra.mxu0 %v1420
  %v1422 = vpop.f32.mrf.mxu0
  %v1423 = vadd.f32 %v1246, %v1422
  %v1424 = vpop.f32.mrf.mxu0
  %1425 = vmatprep.mubr.f32.mxu0 0.0
  %v1426 = vand.u32 %v99, 4294901760
  %1427 = vmatmul.mubr.f32.gmra.mxu0 %v1426
  %v1428 = vpop.f32.mrf.mxu0
  %v1429 = vadd.f32 %v1252, %v1428
  %v1430 = vpop.f32.mrf.mxu0
  %1431 = vmatprep.mubr.f32.mxu0 0.0
  %v1432 = vand.u32 %v102, 4294901760
  %1433 = vmatmul.mubr.f32.gmra.mxu0 %v1432
  %v1434 = vpop.f32.mrf.mxu0
  %v1435 = vadd.f32 %v1258, %v1434
  %v1436 = vpop.f32.mrf.mxu0
  %1437 = vdwg.mxu0
  %v1438 = vld [vmem:[%s2] sm:$0xff]
  %v1439 = vld [vmem:[%s2 + $0x8] sm:$0xff]
  %v1440 = vld [vmem:[%s2 + $0x10] sm:$0xff]
  %v1441 = vld [vmem:[%s2 + $0x18] sm:$0xff]
  %v1442 = vld [vmem:[%s2 + $0x20] sm:$0xff]
  %v1443 = vld [vmem:[%s2 + $0x28] sm:$0xff]
  %v1444 = vld [vmem:[%s2 + $0x30] sm:$0xff]
  %v1445 = vld [vmem:[%s2 + $0x38] sm:$0xff]
  %v1446 = vld [vmem:[%s2 + $0x40] sm:$0xff]
  %v1447 = vld [vmem:[%s2 + $0x48] sm:$0xff]
  %v1448 = vld [vmem:[%s2 + $0x50] sm:$0xff]
  %v1449 = vld [vmem:[%s2 + $0x58] sm:$0xff]
  %v1450 = vld [vmem:[%s2 + $0x60] sm:$0xff]
  %v1451 = vld [vmem:[%s2 + $0x68] sm:$0xff]
  %v1452 = vld [vmem:[%s2 + $0x70] sm:$0xff]
  %v1453 = vld [vmem:[%s2 + $0x78] sm:$0xff]
  %v1454 = vld [vmem:[%s3] sm:$0x1]
  %1456 = vset.pattern.permute.xlu0 0
  %1457 = vperm.xlu0 %1456, %v1438
  %v1458 = vpop.permute.xlu0 %1457
  %1461 = vset.pattern.permute.xlu0 0
  %1462 = vperm.xlu0 %1461, %v1439
  %v1463 = vpop.permute.xlu0 %1462
  %1466 = vset.pattern.permute.xlu0 0
  %1467 = vperm.xlu0 %1466, %v1440
  %v1468 = vpop.permute.xlu0 %1467
  %1471 = vset.pattern.permute.xlu0 0
  %1472 = vperm.xlu0 %1471, %v1441
  %v1473 = vpop.permute.xlu0 %1472
  %1476 = vset.pattern.permute.xlu0 0
  %1477 = vperm.xlu0 %1476, %v1442
  %v1478 = vpop.permute.xlu0 %1477
  %1481 = vset.pattern.permute.xlu0 0
  %1482 = vperm.xlu0 %1481, %v1443
  %v1483 = vpop.permute.xlu0 %1482
  %1486 = vset.pattern.permute.xlu0 0
  %1487 = vperm.xlu0 %1486, %v1444
  %v1488 = vpop.permute.xlu0 %1487
  %1491 = vset.pattern.permute.xlu0 0
  %1492 = vperm.xlu0 %1491, %v1445
  %v1493 = vpop.permute.xlu0 %1492
  %1496 = vset.pattern.permute.xlu0 0
  %1497 = vperm.xlu0 %1496, %v1446
  %v1498 = vpop.permute.xlu0 %1497
  %1501 = vset.pattern.permute.xlu0 0
  %1502 = vperm.xlu0 %1501, %v1447
  %v1503 = vpop.permute.xlu0 %1502
  %1506 = vset.pattern.permute.xlu0 0
  %1507 = vperm.xlu0 %1506, %v1448
  %v1508 = vpop.permute.xlu0 %1507
  %1511 = vset.pattern.permute.xlu0 0
  %1512 = vperm.xlu0 %1511, %v1449
  %v1513 = vpop.permute.xlu0 %1512
  %1516 = vset.pattern.permute.xlu0 0
  %1517 = vperm.xlu0 %1516, %v1450
  %v1518 = vpop.permute.xlu0 %1517
  %1521 = vset.pattern.permute.xlu0 0
  %1522 = vperm.xlu0 %1521, %v1451
  %v1523 = vpop.permute.xlu0 %1522
  %1526 = vset.pattern.permute.xlu0 0
  %1527 = vperm.xlu0 %1526, %v1452
  %v1528 = vpop.permute.xlu0 %1527
  %1531 = vset.pattern.permute.xlu0 0
  %1532 = vperm.xlu0 %1531, %v1453
  %v1533 = vpop.permute.xlu0 %1532
  %v1536 = vlaneseq
  %v1537 = vshrl.u32 %v1536, 7
  %v1538 = vsub.s32 0, %v1537
  %v1539 = vrot.slane %v1454, %v1538
  %v1541 = vadd.f32 %v1458, %v1539
  %v1542 = vadd.f32 %v1463, %v1539
  %v1543 = vadd.f32 %v1468, %v1539
  %v1544 = vadd.f32 %v1473, %v1539
  %v1545 = vadd.f32 %v1478, %v1539
  %v1546 = vadd.f32 %v1483, %v1539
  %v1547 = vadd.f32 %v1488, %v1539
  %v1548 = vadd.f32 %v1493, %v1539
  %v1549 = vadd.f32 %v1498, %v1539
  %v1550 = vadd.f32 %v1503, %v1539
  %v1551 = vadd.f32 %v1508, %v1539
  %v1552 = vadd.f32 %v1513, %v1539
  %v1553 = vadd.f32 %v1518, %v1539
  %v1554 = vadd.f32 %v1523, %v1539
  %v1555 = vadd.f32 %v1528, %v1539
  %v1556 = vadd.f32 %v1533, %v1539
  %v1557 = vmul.f32 %v1345, 2.0
  %v1558 = vmul.f32 %v1351, 2.0
  %v1559 = vmul.f32 %v1357, 2.0
  %v1560 = vmul.f32 %v1363, 2.0
  %v1561 = vmul.f32 %v1369, 2.0
  %v1562 = vmul.f32 %v1375, 2.0
  %v1563 = vmul.f32 %v1381, 2.0
  %v1564 = vmul.f32 %v1387, 2.0
  %v1565 = vmul.f32 %v1393, 2.0
  %v1566 = vmul.f32 %v1399, 2.0
  %v1567 = vmul.f32 %v1405, 2.0
  %v1568 = vmul.f32 %v1411, 2.0
  %v1569 = vmul.f32 %v1417, 2.0
  %v1570 = vmul.f32 %v1423, 2.0
  %v1571 = vmul.f32 %v1429, 2.0
  %v1572 = vmul.f32 %v1435, 2.0
  %v1573 = vsub.f32 %v1541, %v1557
  %v1574 = vsub.f32 %v1542, %v1558
  %v1575 = vsub.f32 %v1543, %v1559
  %v1576 = vsub.f32 %v1544, %v1560
  %v1577 = vsub.f32 %v1545, %v1561
  %v1578 = vsub.f32 %v1546, %v1562
  %v1579 = vsub.f32 %v1547, %v1563
  %v1580 = vsub.f32 %v1548, %v1564
  %v1581 = vsub.f32 %v1549, %v1565
  %v1582 = vsub.f32 %v1550, %v1566
  %v1583 = vsub.f32 %v1551, %v1567
  %v1584 = vsub.f32 %v1552, %v1568
  %v1585 = vsub.f32 %v1553, %v1569
  %v1586 = vsub.f32 %v1554, %v1570
  %v1587 = vsub.f32 %v1555, %v1571
  %v1588 = vsub.f32 %v1556, %v1572
  %v1589 = vmax.f32 %v1573, 0.0
  %v1590 = vmax.f32 %v1574, 0.0
  %v1591 = vmax.f32 %v1575, 0.0
  %v1592 = vmax.f32 %v1576, 0.0
  %v1593 = vmax.f32 %v1577, 0.0
  %v1594 = vmax.f32 %v1578, 0.0
  %v1595 = vmax.f32 %v1579, 0.0
  %v1596 = vmax.f32 %v1580, 0.0
  %v1597 = vmax.f32 %v1581, 0.0
  %v1598 = vmax.f32 %v1582, 0.0
  %v1599 = vmax.f32 %v1583, 0.0
  %v1600 = vmax.f32 %v1584, 0.0
  %v1601 = vmax.f32 %v1585, 0.0
  %v1602 = vmax.f32 %v1586, 0.0
  %v1603 = vmax.f32 %v1587, 0.0
  %v1604 = vmax.f32 %v1588, 0.0
  %s1605 = smul.u32 0, 128
  %v1606 = vlaneseq
  %v1607 = vshrl.u32 %v1606, 7
  %v1608 = vadd.s32 %v1607, 8
  %v1609 = vadd.s32 %v1607, 16
  %v1610 = vadd.s32 %v1607, 24
  %v1611 = vadd.s32 %v1607, 32
  %v1612 = vadd.s32 %v1607, 40
  %v1613 = vadd.s32 %v1607, 48
  %v1614 = vadd.s32 %v1607, 56
  %v1615 = vadd.s32 %v1607, 64
  %v1616 = vadd.s32 %v1607, 72
  %v1617 = vadd.s32 %v1607, 80
  %v1618 = vadd.s32 %v1607, 88
  %v1619 = vadd.s32 %v1607, 96
  %v1620 = vadd.s32 %v1607, 104
  %v1621 = vadd.s32 %v1607, 112
  %v1622 = vadd.s32 %v1607, 120
  %v1623 = vstv %s1605
  %v1624 = vadd.s32 %v1623, %v1607
  %v1625 = vadd.s32 %v1623, %v1608
  %v1626 = vadd.s32 %v1623, %v1609
  %v1627 = vadd.s32 %v1623, %v1610
  %v1628 = vadd.s32 %v1623, %v1611
  %v1629 = vadd.s32 %v1623, %v1612
  %v1630 = vadd.s32 %v1623, %v1613
  %v1631 = vadd.s32 %v1623, %v1614
  %v1632 = vadd.s32 %v1623, %v1615
  %v1633 = vadd.s32 %v1623, %v1616
  %v1634 = vadd.s32 %v1623, %v1617
  %v1635 = vadd.s32 %v1623, %v1618
  %v1636 = vadd.s32 %v1623, %v1619
  %v1637 = vadd.s32 %v1623, %v1620
  %v1638 = vadd.s32 %v1623, %v1621
  %v1639 = vadd.s32 %v1623, %v1622
  %s1640 = smul.u32 0, 128
  %v1641 = vlaneseq
  %v1642 = vand.u32 %v1641, 127
  %v1643 = vstv %s1640
  %v1644 = vadd.s32 %v1643, %v1642
  %vm1645 = vcmp.lt.s32.totalorder %v1624, 16
  %vm1646 = vcmp.lt.s32.totalorder %v1625, 16
  %vm1647 = vcmp.lt.s32.totalorder %v1626, 16
  %vm1648 = vcmp.lt.s32.totalorder %v1627, 16
  %vm1649 = vcmp.lt.s32.totalorder %v1628, 16
  %vm1650 = vcmp.lt.s32.totalorder %v1629, 16
  %vm1651 = vcmp.lt.s32.totalorder %v1630, 16
  %vm1652 = vcmp.lt.s32.totalorder %v1631, 16
  %vm1653 = vcmp.lt.s32.totalorder %v1632, 16
  %vm1654 = vcmp.lt.s32.totalorder %v1633, 16
  %vm1655 = vcmp.lt.s32.totalorder %v1634, 16
  %vm1656 = vcmp.lt.s32.totalorder %v1635, 16
  %vm1657 = vcmp.lt.s32.totalorder %v1636, 16
  %vm1658 = vcmp.lt.s32.totalorder %v1637, 16
  %vm1659 = vcmp.lt.s32.totalorder %v1638, 16
  %vm1660 = vcmp.lt.s32.totalorder %v1639, 16
  %vm1661 = vcmp.lt.s32.totalorder %v1644, 16
  %vm1662 = vmand %vm1645, %vm1661
  %vm1663 = vmand %vm1646, %vm1661
  %vm1664 = vmand %vm1647, %vm1661
  %vm1665 = vmand %vm1648, %vm1661
  %vm1666 = vmand %vm1649, %vm1661
  %vm1667 = vmand %vm1650, %vm1661
  %vm1668 = vmand %vm1651, %vm1661
  %vm1669 = vmand %vm1652, %vm1661
  %vm1670 = vmand %vm1653, %vm1661
  %vm1671 = vmand %vm1654, %vm1661
  %vm1672 = vmand %vm1655, %vm1661
  %vm1673 = vmand %vm1656, %vm1661
  %vm1674 = vmand %vm1657, %vm1661
  %vm1675 = vmand %vm1658, %vm1661
  %vm1676 = vmand %vm1659, %vm1661
  %vm1677 = vmand %vm1660, %vm1661
  %vm1678 = vcmp.lt.s32.totalorder %v1624, %v1644
  %vm1679 = vcmp.lt.s32.totalorder %v1625, %v1644
  %vm1680 = vcmp.lt.s32.totalorder %v1626, %v1644
  %vm1681 = vcmp.lt.s32.totalorder %v1627, %v1644
  %vm1682 = vcmp.lt.s32.totalorder %v1628, %v1644
  %vm1683 = vcmp.lt.s32.totalorder %v1629, %v1644
  %vm1684 = vcmp.lt.s32.totalorder %v1630, %v1644
  %vm1685 = vcmp.lt.s32.totalorder %v1631, %v1644
  %vm1686 = vcmp.lt.s32.totalorder %v1632, %v1644
  %vm1687 = vcmp.lt.s32.totalorder %v1633, %v1644
  %vm1688 = vcmp.lt.s32.totalorder %v1634, %v1644
  %vm1689 = vcmp.lt.s32.totalorder %v1635, %v1644
  %vm1690 = vcmp.lt.s32.totalorder %v1636, %v1644
  %vm1691 = vcmp.lt.s32.totalorder %v1637, %v1644
  %vm1692 = vcmp.lt.s32.totalorder %v1638, %v1644
  %vm1693 = vcmp.lt.s32.totalorder %v1639, %v1644
  %vm1694 = vmand %vm1662, %vm1678
  %vm1695 = vmand %vm1663, %vm1679
  %vm1696 = vmand %vm1664, %vm1680
  %vm1697 = vmand %vm1665, %vm1681
  %vm1698 = vmand %vm1666, %vm1682
  %vm1699 = vmand %vm1667, %vm1683
  %vm1700 = vmand %vm1668, %vm1684
  %vm1701 = vmand %vm1669, %vm1685
  %vm1702 = vmand %vm1670, %vm1686
  %vm1703 = vmand %vm1671, %vm1687
  %vm1704 = vmand %vm1672, %vm1688
  %vm1705 = vmand %vm1673, %vm1689
  %vm1706 = vmand %vm1674, %vm1690
  %vm1707 = vmand %vm1675, %vm1691
  %vm1708 = vmand %vm1676, %vm1692
  %vm1709 = vmand %vm1677, %vm1693
  %v1710 = vld [vmem:[%s4] sm:$0xff]
  %v1711 = vld [vmem:[%s4 + $0x8] sm:$0xff]
  %v1712 = vld [vmem:[%s4 + $0x10] sm:$0xff]
  %v1713 = vld [vmem:[%s4 + $0x18] sm:$0xff]
  %v1714 = vld [vmem:[%s4 + $0x20] sm:$0xff]
  %v1715 = vld [vmem:[%s4 + $0x28] sm:$0xff]
  %v1716 = vld [vmem:[%s4 + $0x30] sm:$0xff]
  %v1717 = vld [vmem:[%s4 + $0x38] sm:$0xff]
  %v1718 = vld [vmem:[%s4 + $0x40] sm:$0xff]
  %v1719 = vld [vmem:[%s4 + $0x48] sm:$0xff]
  %v1720 = vld [vmem:[%s4 + $0x50] sm:$0xff]
  %v1721 = vld [vmem:[%s4 + $0x58] sm:$0xff]
  %v1722 = vld [vmem:[%s4 + $0x60] sm:$0xff]
  %v1723 = vld [vmem:[%s4 + $0x68] sm:$0xff]
  %v1724 = vld [vmem:[%s4 + $0x70] sm:$0xff]
  %v1725 = vld [vmem:[%s4 + $0x78] sm:$0xff]
  %v1726 = vld [vmem:[%s5] sm:$0x1]
  %1727 = vset.pattern.permute.xlu0 0
  %1728 = vperm.xlu0 %1727, %v1710
  %v1729 = vpop.permute.xlu0 %1728
  %1730 = vset.pattern.permute.xlu0 0
  %1731 = vperm.xlu0 %1730, %v1711
  %v1732 = vpop.permute.xlu0 %1731
  %1733 = vset.pattern.permute.xlu0 0
  %1734 = vperm.xlu0 %1733, %v1712
  %v1735 = vpop.permute.xlu0 %1734
  %1736 = vset.pattern.permute.xlu0 0
  %1737 = vperm.xlu0 %1736, %v1713
  %v1738 = vpop.permute.xlu0 %1737
  %1739 = vset.pattern.permute.xlu0 0
  %1740 = vperm.xlu0 %1739, %v1714
  %v1741 = vpop.permute.xlu0 %1740
  %1742 = vset.pattern.permute.xlu0 0
  %1743 = vperm.xlu0 %1742, %v1715
  %v1744 = vpop.permute.xlu0 %1743
  %1745 = vset.pattern.permute.xlu0 0
  %1746 = vperm.xlu0 %1745, %v1716
  %v1747 = vpop.permute.xlu0 %1746
  %1748 = vset.pattern.permute.xlu0 0
  %1749 = vperm.xlu0 %1748, %v1717
  %v1750 = vpop.permute.xlu0 %1749
  %1751 = vset.pattern.permute.xlu0 0
  %1752 = vperm.xlu0 %1751, %v1718
  %v1753 = vpop.permute.xlu0 %1752
  %1754 = vset.pattern.permute.xlu0 0
  %1755 = vperm.xlu0 %1754, %v1719
  %v1756 = vpop.permute.xlu0 %1755
  %1757 = vset.pattern.permute.xlu0 0
  %1758 = vperm.xlu0 %1757, %v1720
  %v1759 = vpop.permute.xlu0 %1758
  %1760 = vset.pattern.permute.xlu0 0
  %1761 = vperm.xlu0 %1760, %v1721
  %v1762 = vpop.permute.xlu0 %1761
  %1763 = vset.pattern.permute.xlu0 0
  %1764 = vperm.xlu0 %1763, %v1722
  %v1765 = vpop.permute.xlu0 %1764
  %1766 = vset.pattern.permute.xlu0 0
  %1767 = vperm.xlu0 %1766, %v1723
  %v1768 = vpop.permute.xlu0 %1767
  %1769 = vset.pattern.permute.xlu0 0
  %1770 = vperm.xlu0 %1769, %v1724
  %v1771 = vpop.permute.xlu0 %1770
  %1772 = vset.pattern.permute.xlu0 0
  %1773 = vperm.xlu0 %1772, %v1725
  %v1774 = vpop.permute.xlu0 %1773
  %v1775 = vlaneseq
  %v1776 = vshrl.u32 %v1775, 7
  %v1777 = vsub.s32 0, %v1776
  %v1778 = vrot.slane %v1726, %v1777
  %vm1779 = vcmp.eq.s32.totalorder %v1729, %v1778
  %vm1780 = vcmp.eq.s32.totalorder %v1732, %v1778
  %vm1781 = vcmp.eq.s32.totalorder %v1735, %v1778
  %vm1782 = vcmp.eq.s32.totalorder %v1738, %v1778
  %vm1783 = vcmp.eq.s32.totalorder %v1741, %v1778
  %vm1784 = vcmp.eq.s32.totalorder %v1744, %v1778
  %vm1785 = vcmp.eq.s32.totalorder %v1747, %v1778
  %vm1786 = vcmp.eq.s32.totalorder %v1750, %v1778
  %vm1787 = vcmp.eq.s32.totalorder %v1753, %v1778
  %vm1788 = vcmp.eq.s32.totalorder %v1756, %v1778
  %vm1789 = vcmp.eq.s32.totalorder %v1759, %v1778
  %vm1790 = vcmp.eq.s32.totalorder %v1762, %v1778
  %vm1791 = vcmp.eq.s32.totalorder %v1765, %v1778
  %vm1792 = vcmp.eq.s32.totalorder %v1768, %v1778
  %vm1793 = vcmp.eq.s32.totalorder %v1771, %v1778
  %vm1794 = vcmp.eq.s32.totalorder %v1774, %v1778
  %v1795 = vrsqrt.pop %v1589
  %v1796 = vmul.f32 %v1589, %v1795
  %vm1797 = vcmp.eq.f32.partialorder %v1589, inf
  %v1798 = vsel %vm1797, %v1589, %v1796
  %vm1799 = vcmp.eq.f32.partialorder %v1589, 0.0
  %v1800 = vand.u32 %v1589, 2147483648
  %v1801 = vsel %vm1799, %v1800, %v1798
  %v1802 = vrsqrt.pop %v1590
  %v1803 = vmul.f32 %v1590, %v1802
  %vm1804 = vcmp.eq.f32.partialorder %v1590, inf
  %v1805 = vsel %vm1804, %v1590, %v1803
  %vm1806 = vcmp.eq.f32.partialorder %v1590, 0.0
  %v1807 = vand.u32 %v1590, 2147483648
  %v1808 = vsel %vm1806, %v1807, %v1805
  %v1809 = vrsqrt.pop %v1591
  %v1810 = vmul.f32 %v1591, %v1809
  %vm1811 = vcmp.eq.f32.partialorder %v1591, inf
  %v1812 = vsel %vm1811, %v1591, %v1810
  %vm1813 = vcmp.eq.f32.partialorder %v1591, 0.0
  %v1814 = vand.u32 %v1591, 2147483648
  %v1815 = vsel %vm1813, %v1814, %v1812
  %v1816 = vrsqrt.pop %v1592
  %v1817 = vmul.f32 %v1592, %v1816
  %vm1818 = vcmp.eq.f32.partialorder %v1592, inf
  %v1819 = vsel %vm1818, %v1592, %v1817
  %vm1820 = vcmp.eq.f32.partialorder %v1592, 0.0
  %v1821 = vand.u32 %v1592, 2147483648
  %v1822 = vsel %vm1820, %v1821, %v1819
  %v1823 = vrsqrt.pop %v1593
  %v1824 = vmul.f32 %v1593, %v1823
  %vm1825 = vcmp.eq.f32.partialorder %v1593, inf
  %v1826 = vsel %vm1825, %v1593, %v1824
  %vm1827 = vcmp.eq.f32.partialorder %v1593, 0.0
  %v1828 = vand.u32 %v1593, 2147483648
  %v1829 = vsel %vm1827, %v1828, %v1826
  %v1830 = vrsqrt.pop %v1594
  %v1831 = vmul.f32 %v1594, %v1830
  %vm1832 = vcmp.eq.f32.partialorder %v1594, inf
  %v1833 = vsel %vm1832, %v1594, %v1831
  %vm1834 = vcmp.eq.f32.partialorder %v1594, 0.0
  %v1835 = vand.u32 %v1594, 2147483648
  %v1836 = vsel %vm1834, %v1835, %v1833
  %v1837 = vrsqrt.pop %v1595
  %v1838 = vmul.f32 %v1595, %v1837
  %vm1839 = vcmp.eq.f32.partialorder %v1595, inf
  %v1840 = vsel %vm1839, %v1595, %v1838
  %vm1841 = vcmp.eq.f32.partialorder %v1595, 0.0
  %v1842 = vand.u32 %v1595, 2147483648
  %v1843 = vsel %vm1841, %v1842, %v1840
  %v1844 = vrsqrt.pop %v1596
  %v1845 = vmul.f32 %v1596, %v1844
  %vm1846 = vcmp.eq.f32.partialorder %v1596, inf
  %v1847 = vsel %vm1846, %v1596, %v1845
  %vm1848 = vcmp.eq.f32.partialorder %v1596, 0.0
  %v1849 = vand.u32 %v1596, 2147483648
  %v1850 = vsel %vm1848, %v1849, %v1847
  %v1851 = vrsqrt.pop %v1597
  %v1852 = vmul.f32 %v1597, %v1851
  %vm1853 = vcmp.eq.f32.partialorder %v1597, inf
  %v1854 = vsel %vm1853, %v1597, %v1852
  %vm1855 = vcmp.eq.f32.partialorder %v1597, 0.0
  %v1856 = vand.u32 %v1597, 2147483648
  %v1857 = vsel %vm1855, %v1856, %v1854
  %v1858 = vrsqrt.pop %v1598
  %v1859 = vmul.f32 %v1598, %v1858
  %vm1860 = vcmp.eq.f32.partialorder %v1598, inf
  %v1861 = vsel %vm1860, %v1598, %v1859
  %vm1862 = vcmp.eq.f32.partialorder %v1598, 0.0
  %v1863 = vand.u32 %v1598, 2147483648
  %v1864 = vsel %vm1862, %v1863, %v1861
  %v1865 = vrsqrt.pop %v1599
  %v1866 = vmul.f32 %v1599, %v1865
  %vm1867 = vcmp.eq.f32.partialorder %v1599, inf
  %v1868 = vsel %vm1867, %v1599, %v1866
  %vm1869 = vcmp.eq.f32.partialorder %v1599, 0.0
  %v1870 = vand.u32 %v1599, 2147483648
  %v1871 = vsel %vm1869, %v1870, %v1868
  %v1872 = vrsqrt.pop %v1600
  %v1873 = vmul.f32 %v1600, %v1872
  %vm1874 = vcmp.eq.f32.partialorder %v1600, inf
  %v1875 = vsel %vm1874, %v1600, %v1873
  %vm1876 = vcmp.eq.f32.partialorder %v1600, 0.0
  %v1877 = vand.u32 %v1600, 2147483648
  %v1878 = vsel %vm1876, %v1877, %v1875
  %v1879 = vrsqrt.pop %v1601
  %v1880 = vmul.f32 %v1601, %v1879
  %vm1881 = vcmp.eq.f32.partialorder %v1601, inf
  %v1882 = vsel %vm1881, %v1601, %v1880
  %vm1883 = vcmp.eq.f32.partialorder %v1601, 0.0
  %v1884 = vand.u32 %v1601, 2147483648
  %v1885 = vsel %vm1883, %v1884, %v1882
  %v1886 = vrsqrt.pop %v1602
  %v1887 = vmul.f32 %v1602, %v1886
  %vm1888 = vcmp.eq.f32.partialorder %v1602, inf
  %v1889 = vsel %vm1888, %v1602, %v1887
  %vm1890 = vcmp.eq.f32.partialorder %v1602, 0.0
  %v1891 = vand.u32 %v1602, 2147483648
  %v1892 = vsel %vm1890, %v1891, %v1889
  %v1893 = vrsqrt.pop %v1603
  %v1894 = vmul.f32 %v1603, %v1893
  %vm1895 = vcmp.eq.f32.partialorder %v1603, inf
  %v1896 = vsel %vm1895, %v1603, %v1894
  %vm1897 = vcmp.eq.f32.partialorder %v1603, 0.0
  %v1898 = vand.u32 %v1603, 2147483648
  %v1899 = vsel %vm1897, %v1898, %v1896
  %v1900 = vrsqrt.pop %v1604
  %v1901 = vmul.f32 %v1604, %v1900
  %vm1902 = vcmp.eq.f32.partialorder %v1604, inf
  %v1903 = vsel %vm1902, %v1604, %v1901
  %vm1904 = vcmp.eq.f32.partialorder %v1604, 0.0
  %v1905 = vand.u32 %v1604, 2147483648
  %v1906 = vsel %vm1904, %v1905, %v1903
  %v1907 = vsub.f32 1.0, %v1801
  %v1908 = vsub.f32 1.0, %v1808
  %v1909 = vsub.f32 1.0, %v1815
  %v1910 = vsub.f32 1.0, %v1822
  %v1911 = vsub.f32 1.0, %v1829
  %v1912 = vsub.f32 1.0, %v1836
  %v1913 = vsub.f32 1.0, %v1843
  %v1914 = vsub.f32 1.0, %v1850
  %v1915 = vsub.f32 1.0, %v1857
  %v1916 = vsub.f32 1.0, %v1864
  %v1917 = vsub.f32 1.0, %v1871
  %v1918 = vsub.f32 1.0, %v1878
  %v1919 = vsub.f32 1.0, %v1885
  %v1920 = vsub.f32 1.0, %v1892
  %v1921 = vsub.f32 1.0, %v1899
  %v1922 = vsub.f32 1.0, %v1906
  %v1923 = vmax.f32 %v1907, 0.0
  %v1924 = vmax.f32 %v1908, 0.0
  %v1925 = vmax.f32 %v1909, 0.0
  %v1926 = vmax.f32 %v1910, 0.0
  %v1927 = vmax.f32 %v1911, 0.0
  %v1928 = vmax.f32 %v1912, 0.0
  %v1929 = vmax.f32 %v1913, 0.0
  %v1930 = vmax.f32 %v1914, 0.0
  %v1931 = vmax.f32 %v1915, 0.0
  %v1932 = vmax.f32 %v1916, 0.0
  %v1933 = vmax.f32 %v1917, 0.0
  %v1934 = vmax.f32 %v1918, 0.0
  %v1935 = vmax.f32 %v1919, 0.0
  %v1936 = vmax.f32 %v1920, 0.0
  %v1937 = vmax.f32 %v1921, 0.0
  %v1938 = vmax.f32 %v1922, 0.0
  %v1939 = vmul.f32 %v1923, %v1923
  %v1940 = vmul.f32 %v1924, %v1924
  %v1941 = vmul.f32 %v1925, %v1925
  %v1942 = vmul.f32 %v1926, %v1926
  %v1943 = vmul.f32 %v1927, %v1927
  %v1944 = vmul.f32 %v1928, %v1928
  %v1945 = vmul.f32 %v1929, %v1929
  %v1946 = vmul.f32 %v1930, %v1930
  %v1947 = vmul.f32 %v1931, %v1931
  %v1948 = vmul.f32 %v1932, %v1932
  %v1949 = vmul.f32 %v1933, %v1933
  %v1950 = vmul.f32 %v1934, %v1934
  %v1951 = vmul.f32 %v1935, %v1935
  %v1952 = vmul.f32 %v1936, %v1936
  %v1953 = vmul.f32 %v1937, %v1937
  %v1954 = vmul.f32 %v1938, %v1938
  %v1955 = vsel %vm1779, %v1589, %v1939
  %v1956 = vsel %vm1780, %v1590, %v1940
  %v1957 = vsel %vm1781, %v1591, %v1941
  %v1958 = vsel %vm1782, %v1592, %v1942
  %v1959 = vsel %vm1783, %v1593, %v1943
  %v1960 = vsel %vm1784, %v1594, %v1944
  %v1961 = vsel %vm1785, %v1595, %v1945
  %v1962 = vsel %vm1786, %v1596, %v1946
  %v1963 = vsel %vm1787, %v1597, %v1947
  %v1964 = vsel %vm1788, %v1598, %v1948
  %v1965 = vsel %vm1789, %v1599, %v1949
  %v1966 = vsel %vm1790, %v1600, %v1950
  %v1967 = vsel %vm1791, %v1601, %v1951
  %v1968 = vsel %vm1792, %v1602, %v1952
  %v1969 = vsel %vm1793, %v1603, %v1953
  %v1970 = vsel %vm1794, %v1604, %v1954
  %v1971 = vsel %vm1694, %v1955, 0.0
  %v1972 = vsel %vm1695, %v1956, 0.0
  %v1973 = vsel %vm1696, %v1957, 0.0
  %v1974 = vsel %vm1697, %v1958, 0.0
  %v1975 = vsel %vm1698, %v1959, 0.0
  %v1976 = vsel %vm1699, %v1960, 0.0
  %v1977 = vsel %vm1700, %v1961, 0.0
  %v1978 = vsel %vm1701, %v1962, 0.0
  %v1979 = vsel %vm1702, %v1963, 0.0
  %v1980 = vsel %vm1703, %v1964, 0.0
  %v1981 = vsel %vm1704, %v1965, 0.0
  %v1982 = vsel %vm1705, %v1966, 0.0
  %v1983 = vsel %vm1706, %v1967, 0.0
  %v1984 = vsel %vm1707, %v1968, 0.0
  %v1985 = vsel %vm1708, %v1969, 0.0
  %v1986 = vsel %vm1709, %v1970, 0.0
  %v1987 = vadd.f32 %v1971, %v1972
  %v1988 = vadd.f32 %v1987, %v1973
  %v1989 = vadd.f32 %v1988, %v1974
  %v1990 = vadd.f32 %v1989, %v1975
  %v1991 = vadd.f32 %v1990, %v1976
  %v1992 = vadd.f32 %v1991, %v1977
  %v1993 = vadd.f32 %v1992, %v1978
  %v1994 = vadd.f32 %v1993, %v1979
  %v1995 = vadd.f32 %v1994, %v1980
  %v1996 = vadd.f32 %v1995, %v1981
  %v1997 = vadd.f32 %v1996, %v1982
  %v1998 = vadd.f32 %v1997, %v1983
  %v1999 = vadd.f32 %v1998, %v1984
  %v2000 = vadd.f32 %v1999, %v1985
  %v2001 = vadd.f32 %v2000, %v1986
  %2002 = vadd.xlane.f32.xlu0 %v2001
  %v2003 = vpop.xlane.xlu0 %2002
  %v2004 = vrot.slane %v2003, 4
  %v2005 = vadd.f32 %v2003, %v2004
  %v2006 = vrot.slane %v2005, 2
  %v2007 = vadd.f32 %v2005, %v2006
  %v2008 = vrot.slane %v2007, 1
  %v2009 = vadd.f32 %v2007, %v2008
  %s2010 = vtos %v2009
  %v2011 = vstv %s2010
  %2012 = vst [vmem:[%s6] sm:$0xff] %v2011
  // Predicated region
  $region26: #{online_contrastive_loss.1} parent=0 // pred_check
    _
  $region27: #{online_contrastive_loss.1} parent=0 // pred_check_branch
    %2014 = sbr.rel (0) target = $region29
  $region28: #{online_contrastive_loss.1} parent=0 // pred_region
    _
  $region29: #{online_contrastive_loss.1} parent=0 // pred_fallthru
    _
  // Predicated region
  $region30: #{online_contrastive_loss.1} parent=0 // pred_check
    _
  $region31: #{online_contrastive_loss.1} parent=0 // pred_check_branch
    %2016 = sbr.rel (0) target = $region33
  $region32: #{online_contrastive_loss.1} parent=0 // pred_region
    _
  $region33: #{online_contrastive_loss.1} parent=0 // pred_fallthru
    _

</llo_original>
